<compile_context>
chip_gen: v5e
topology: v5e:2x2
jax: 0.10.0
libtpu: 0.0.40
codegen_flags: <defaults>
</compile_context>

<pallas_src>
import functools
import numpy as np
import jax
import jax.numpy as jnp
from jax import lax
from jax.experimental import pallas as pl
from jax.experimental.pallas import tpu as pltpu


def _dual_stream_kernel(hidden_ref, mask_ref,
                        wst_ref, bst_ref,
                        wqkv1_ref, bqkv1_ref,   # from stream1: [q1*inv | k2 | v2]
                        wqkv2_ref, bqkv2_ref,   # from stream2: [q2*inv | k1 | v1]
                        wo1_ref, bo1_ref, wo2_ref, bo2_ref,
                        wfa_ref, wfb_ref, bf_ref,
                        out_ref, ctx_sc, *, hidden_size, num_heads):
    H = hidden_size
    nh = num_heads
    hd = H // nh
    Bt, S, Henc = hidden_ref.shape
    rows = Bt * S
    Hp = out_ref.shape[-1]

    f32 = jnp.float32
    bf16 = jnp.bfloat16

    # Additive key mask bias (0 valid / -1e9 masked), computed once per grid step.
    mask_blk = mask_ref[...]                                        # (Bt, 1, S) f32
    bias_all = jnp.where(mask_blk > 0.5, 0.0, -1e9).astype(f32)     # (Bt, 1, S)

    h = hidden_ref[...].reshape(rows, Henc).astype(bf16)

    # Fused stream transforms: one wide matmul, split along lanes.
    st = jnp.dot(h, wst_ref[...], preferred_element_type=f32) + bst_ref[...]
    s1 = st[:, :H].astype(bf16)
    s2 = st[:, H:].astype(bf16)

    # Fused q/k/v projections (one wide matmul per stream covers both attention
    # directions; the 1/sqrt(head_dim) scale is folded into the q columns/bias).
    p1 = jnp.dot(s1, wqkv1_ref[...], preferred_element_type=f32) + bqkv1_ref[...]
    p2 = jnp.dot(s2, wqkv2_ref[...], preferred_element_type=f32) + bqkv2_ref[...]
    q1 = p1[:, :H].astype(bf16)
    k2 = p1[:, H:2 * H].astype(bf16)
    v2 = p1[:, 2 * H:].astype(bf16)
    q2 = p2[:, :H].astype(bf16)
    k1 = p2[:, H:2 * H].astype(bf16)
    v1 = p2[:, 2 * H:].astype(bf16)

    def attend(q, k, v, wo_ref_, bo_ref_):
        # Each head's context lands in its lane slice of ctx_sc; the output
        # projection then runs once with the full K=H contraction.
        for b in range(Bt):
            r0 = b * S
            bias_b = jnp.broadcast_to(bias_all[b], (S, S))   # hoisted per batch elem
            qb = q[r0:r0 + S]
            kb = k[r0:r0 + S]
            vb = v[r0:r0 + S]
            for i in range(nh):
                lo = i * hd
                # q_h @ k_h^T, contracting last dims (no explicit transpose).
                sc = lax.dot_general(qb[:, lo:lo + hd], kb[:, lo:lo + hd],
                                     (((1,), (1,)), ((), ())),
                                     preferred_element_type=f32)        # (S, S)
                sc = sc + bias_b                                        # masked_fill(-1e9)
                sc = sc - jnp.max(sc, axis=-1, keepdims=True)
                p = jnp.exp(sc)
                denom = jnp.sum(p, axis=-1, keepdims=True)              # (S, 1)
                ctx = jnp.dot(p.astype(bf16), vb[:, lo:lo + hd],
                              preferred_element_type=f32)               # (S, hd)
                # Normalize AFTER the PV matmul: (S, hd) multiply, EUP reciprocal.
                ctx = ctx * pl.reciprocal(denom, approx=True)
                ctx_sc[r0:r0 + S, lo:lo + hd] = ctx
        ctx_full = ctx_sc[...].astype(bf16)                             # (rows, H)
        return (jnp.dot(ctx_full, wo_ref_[...], preferred_element_type=f32)
                + bo_ref_[...])

    att1 = attend(q1, k1, v1, wo1_ref, bo1_ref)   # cross_attn_1to2(stream1, stream2)
    att2 = attend(q2, k2, v2, wo2_ref, bo2_ref)   # cross_attn_2to1(stream2, stream1)

    # Fusion layer without materializing concat([att1, att2], -1).  Wf columns are
    # zero-padded to Hp (multiple of 128) so the final store is lane-dense.
    fused = (jnp.dot(att1.astype(bf16), wfa_ref[...], preferred_element_type=f32)
             + jnp.dot(att2.astype(bf16), wfb_ref[...], preferred_element_type=f32)
             + bf_ref[...])
    out_ref[...] = fused.reshape(Bt, S, Hp).astype(out_ref.dtype)


def dual_stream_head(last_hidden_state, attention_mask, params, *, num_heads,
                     block_b=None):
    B, S, Henc = last_hidden_state.shape
    H = params["w1"].shape[1]
    hd = H // num_heads
    Hp = ((H + 127) // 128) * 128            # lane-dense output width

    if block_b is None:
        # >= 2 grid blocks whenever B >= 2 (keeps both v7x TensorCores busy) while
        # still batching several sequences per step at larger B (amortizes the
        # ~0.35us per-grid-step overhead on all generations).
        block_b = max(1, B // 2)
    while B % block_b:
        block_b -= 1
    nblk = B // block_b

    f32 = jnp.float32
    bf16 = jnp.bfloat16
    inv = f32(1.0 / (hd ** 0.5))
    mask3 = attention_mask.astype(f32).reshape(B, 1, S)

    # Host-side glue: pack per-layer weights into the fused bf16 matrices the kernel
    # expects; fold the 1/sqrt(head_dim) score scale into the q columns / bias.
    wst = jnp.concatenate([params["w1"], params["w2"]], axis=1).astype(bf16)          # (Henc, 2H)
    bst = jnp.concatenate([params["b1"], params["b2"]]).reshape(1, 2 * H).astype(f32)
    wqkv1 = jnp.concatenate([params["wq1"] * inv, params["wk2"], params["wv2"]],
                            axis=1).astype(bf16)                                      # (H, 3H)
    bqkv1 = jnp.concatenate([params["bq1"] * inv, params["bk2"], params["bv2"]]
                            ).reshape(1, 3 * H).astype(f32)
    wqkv2 = jnp.concatenate([params["wq2"] * inv, params["wk1"], params["wv1"]],
                            axis=1).astype(bf16)                                      # (H, 3H)
    bqkv2 = jnp.concatenate([params["bq2"] * inv, params["bk1"], params["bv1"]]
                            ).reshape(1, 3 * H).astype(f32)
    wo1 = params["wo1"].astype(bf16)
    wo2 = params["wo2"].astype(bf16)
    bo1 = params["bo1"].reshape(1, H).astype(f32)
    bo2 = params["bo2"].reshape(1, H).astype(f32)
    pad = ((0, 0), (0, Hp - H))
    wfa = jnp.pad(params["wf"][:H], pad).astype(bf16)                                 # (H, Hp)
    wfb = jnp.pad(params["wf"][H:], pad).astype(bf16)                                 # (H, Hp)
    bf = jnp.pad(params["bf"], (0, Hp - H)).reshape(1, Hp).astype(f32)

    def full(arr):
        shape = arr.shape
        return pl.BlockSpec(shape, lambda b: (0,) * len(shape))

    kernel = functools.partial(_dual_stream_kernel, hidden_size=H, num_heads=num_heads)
    out = pl.pallas_call(
        kernel,
        out_shape=jax.ShapeDtypeStruct((B, S, Hp), jnp.float32),
        grid_spec=pltpu.PrefetchScalarGridSpec(
            num_scalar_prefetch=0,
            grid=(nblk,),
            in_specs=[
                pl.BlockSpec((block_b, S, Henc), lambda b: (b, 0, 0)),   # last_hidden_state
                pl.BlockSpec((block_b, 1, S), lambda b: (b, 0, 0)),      # attention mask
                full(wst), full(bst),
                full(wqkv1), full(bqkv1),
                full(wqkv2), full(bqkv2),
                full(wo1), full(bo1), full(wo2), full(bo2),
                full(wfa), full(wfb), full(bf),
            ],
            out_specs=pl.BlockSpec((block_b, S, Hp), lambda b: (b, 0, 0)),
            scratch_shapes=[pltpu.VMEM((block_b * S, H), jnp.float32)],
        ),
        compiler_params=pltpu.CompilerParams(
            dimension_semantics=("parallel",),
            vmem_limit_bytes=32 * 1024 * 1024),
    )(last_hidden_state, mask3, wst, bst, wqkv1, bqkv1, wqkv2, bqkv2,
      wo1, bo1, wo2, bo2, wfa, wfb, bf)
    return out[..., :H]   # drop lane padding (no-op when H % 128 == 0)


def reference_dual_stream(last_hidden_state, attention_mask, params, *, num_heads):
    # Pure-JAX mirror of the PyTorch DualStreamNetworks forward (post-encoder).
    B, S, Henc = last_hidden_state.shape
    H = params["w1"].shape[1]
    hd = H // num_heads

    def linear(x, w, b):
        return jnp.dot(x, w) + b

    s1 = linear(last_hidden_state, params["w1"], params["b1"])
    s2 = linear(last_hidden_state, params["w2"], params["b2"])

    def cross_attn(sa, sb, wq, bq, wk, bk, wv, bv, wo, bo):
        q = linear(sa, wq, bq).reshape(B, S, num_heads, hd).transpose(0, 2, 1, 3)
        k = linear(sb, wk, bk).reshape(B, S, num_heads, hd).transpose(0, 2, 1, 3)
        v = linear(sb, wv, bv).reshape(B, S, num_heads, hd).transpose(0, 2, 1, 3)
        sc = jnp.einsum('bhqd,bhkd->bhqk', q, k) / (hd ** 0.5)
        m = attention_mask[:, None, None, :]
        sc = jnp.where(m > 0.5, sc, -1e9)
        p = jax.nn.softmax(sc, axis=-1)
        ctx = jnp.einsum('bhqk,bhkd->bhqd', p, v).transpose(0, 2, 1, 3).reshape(B, S, H)
        return linear(ctx, wo, bo)

    a1 = cross_attn(s1, s2, params["wq1"], params["bq1"], params["wk1"], params["bk1"],
                    params["wv1"], params["bv1"], params["wo1"], params["bo1"])
    a2 = cross_attn(s2, s1, params["wq2"], params["bq2"], params["wk2"], params["bk2"],
                    params["wv2"], params["bv2"], params["wo2"], params["bo2"])
    fused = jnp.concatenate([a1, a2], axis=-1)
    return linear(fused, params["wf"], params["bf"])


if __name__ == "__main__":
    B, S, Henc, H, NH, V = 2, 8, 32, 64, 8, 50

    key = jax.random.PRNGKey(0)
    kit = iter(jax.random.split(key, 40))

    def lin(fan_in, fan_out, scale=0.15):
        w = jax.random.normal(next(kit), (fan_in, fan_out), jnp.float32) * scale
        b = jax.random.normal(next(kit), (fan_out,), jnp.float32) * scale
        return w, b

    params = {}
    params["w1"], params["b1"] = lin(Henc, H)     # stream1_transform
    params["w2"], params["b2"] = lin(Henc, H)     # stream2_transform
    for tag in ("1", "2"):                        # cross_attn_1to2 / cross_attn_2to1
        params["wq" + tag], params["bq" + tag] = lin(H, H)
        params["wk" + tag], params["bk" + tag] = lin(H, H)
        params["wv" + tag], params["bv" + tag] = lin(H, H)
        params["wo" + tag], params["bo" + tag] = lin(H, H)
    params["wf"], params["bf"] = lin(2 * H, H)    # fusion_layer

    # TODO(synk): external transformer encoder not kernelized; deterministic
    #             embedding-lookup stub stands in for encoder(input_ids, mask, token_type_ids).
    emb_table = jax.random.normal(next(kit), (V, Henc), jnp.float32) * 0.3
    input_ids = jax.random.randint(next(kit), (B, S), 0, V)
    token_type_ids = jnp.zeros((B, S), jnp.int32)
    attention_mask = jnp.array([[1, 1, 1, 1, 1, 1, 1, 1],
                                [1, 1, 1, 1, 1, 0, 0, 0]], jnp.float32)
    last_hidden_state = emb_table[input_ids]
    _ = token_type_ids   # unused by the stub encoder

    out = dual_stream_head(last_hidden_state, attention_mask, params, num_heads=NH)
    out = jax.block_until_ready(out)

    ref = reference_dual_stream(last_hidden_state, attention_mask, params, num_heads=NH)
    # Tolerance accounts for bf16 matmul operands in the kernel (f32 accumulation).
    np.testing.assert_allclose(np.asarray(out), np.asarray(ref), rtol=2e-2, atol=2e-2)
    print("KERNEL_OK")
</pallas_src>

<mosaic_0001>
module attributes {stable_mosaic.version = 11 : i64} {
  func.func @_dual_stream_kernel(%arg0: i32, %arg1: memref<1x8x32xf32, #tpu.memory_space<vmem>>, %arg2: memref<1x1x8xf32, #tpu.memory_space<vmem>>, %arg3: memref<32x128xbf16, #tpu.memory_space<vmem>>, %arg4: memref<1x128xf32, #tpu.memory_space<vmem>>, %arg5: memref<64x192xbf16, #tpu.memory_space<vmem>>, %arg6: memref<1x192xf32, #tpu.memory_space<vmem>>, %arg7: memref<64x192xbf16, #tpu.memory_space<vmem>>, %arg8: memref<1x192xf32, #tpu.memory_space<vmem>>, %arg9: memref<64x64xbf16, #tpu.memory_space<vmem>>, %arg10: memref<1x64xf32, #tpu.memory_space<vmem>>, %arg11: memref<64x64xbf16, #tpu.memory_space<vmem>>, %arg12: memref<1x64xf32, #tpu.memory_space<vmem>>, %arg13: memref<64x128xbf16, #tpu.memory_space<vmem>>, %arg14: memref<64x128xbf16, #tpu.memory_space<vmem>>, %arg15: memref<1x128xf32, #tpu.memory_space<vmem>>, %arg16: memref<1x8x128xf32, #tpu.memory_space<vmem>>, %arg17: memref<8x64xf32, #tpu.memory_space<vmem>>) attributes {dimension_semantics = [#tpu.dimension_semantics<parallel>], iteration_bounds = array<i64: 2>, scalar_prefetch = 0 : i64, scratch_operands = 1 : i64, tpu.core_type = #tpu.core_type<tc>, window_params = [{transform_indices = @transform_0, window_bounds = array<i64: 1, 8, 32>}, {transform_indices = @transform_1, window_bounds = array<i64: 1, 1, 8>}, {pipeline_mode = #tpu.pipeline_mode<synchronous>, transform_indices = @transform_2, window_bounds = array<i64: 32, 128>}, {pipeline_mode = #tpu.pipeline_mode<synchronous>, transform_indices = @transform_3, window_bounds = array<i64: 1, 128>}, {pipeline_mode = #tpu.pipeline_mode<synchronous>, transform_indices = @transform_4, window_bounds = array<i64: 64, 192>}, {pipeline_mode = #tpu.pipeline_mode<synchronous>, transform_indices = @transform_5, window_bounds = array<i64: 1, 192>}, {pipeline_mode = #tpu.pipeline_mode<synchronous>, transform_indices = @transform_6, window_bounds = array<i64: 64, 192>}, {pipeline_mode = #tpu.pipeline_mode<synchronous>, transform_indices = @transform_7, window_bounds = array<i64: 1, 192>}, {pipeline_mode = #tpu.pipeline_mode<synchronous>, transform_indices = @transform_8, window_bounds = array<i64: 64, 64>}, {pipeline_mode = #tpu.pipeline_mode<synchronous>, transform_indices = @transform_9, window_bounds = array<i64: 1, 64>}, {pipeline_mode = #tpu.pipeline_mode<synchronous>, transform_indices = @transform_10, window_bounds = array<i64: 64, 64>}, {pipeline_mode = #tpu.pipeline_mode<synchronous>, transform_indices = @transform_11, window_bounds = array<i64: 1, 64>}, {pipeline_mode = #tpu.pipeline_mode<synchronous>, transform_indices = @transform_12, window_bounds = array<i64: 64, 128>}, {pipeline_mode = #tpu.pipeline_mode<synchronous>, transform_indices = @transform_13, window_bounds = array<i64: 64, 128>}, {pipeline_mode = #tpu.pipeline_mode<synchronous>, transform_indices = @transform_14, window_bounds = array<i64: 1, 128>}, {transform_indices = @transform_15, window_bounds = array<i64: 1, 8, 128>}]} {
    %c0 = arith.constant 0 : index
    %c0_0 = arith.constant 0 : index
    %c0_1 = arith.constant 0 : index
    %0 = vector.load %arg2[%c0, %c0_0, %c0_1] : memref<1x1x8xf32, #tpu.memory_space<vmem>>, vector<1x1x8xf32>
    %cst = arith.constant 5.000000e-01 : f32
    %1 = vector.broadcast %cst : f32 to vector<1x1x8xf32>
    %2 = arith.cmpf ogt, %0, %1 : vector<1x1x8xf32>
    %cst_2 = arith.constant 0.000000e+00 : f32
    %cst_3 = arith.constant -1.000000e+09 : f32
    %3 = vector.broadcast %cst_2 : f32 to vector<1x1x8xf32>
    %4 = vector.broadcast %cst_3 : f32 to vector<1x1x8xf32>
    %5 = arith.select %2, %3, %4 : vector<1x1x8xi1>, vector<1x1x8xf32>
    %c0_4 = arith.constant 0 : index
    %c0_5 = arith.constant 0 : index
    %c0_6 = arith.constant 0 : index
    %6 = vector.load %arg1[%c0_4, %c0_5, %c0_6] : memref<1x8x32xf32, #tpu.memory_space<vmem>>, vector<1x8x32xf32>
    %7 = vector.shape_cast %6 : vector<1x8x32xf32> to vector<8x32xf32>
    %8 = arith.truncf %7 : vector<8x32xf32> to vector<8x32xbf16>
    %c0_7 = arith.constant 0 : index
    %c0_8 = arith.constant 0 : index
    %9 = vector.load %arg3[%c0_7, %c0_8] : memref<32x128xbf16, #tpu.memory_space<vmem>>, vector<32x128xbf16>
    %cst_9 = arith.constant dense<0.000000e+00> : vector<8x128xf32>
    %10 = tpu.matmul %8, %9, %cst_9 {dimension_numbers = #tpu.dot_dimension_numbers<[1], [0], [0], [1], [0, 0, 1, 1], [], []>} : vector<8x32xbf16>, vector<32x128xbf16>, vector<8x128xf32> -> vector<8x128xf32>
    %c0_10 = arith.constant 0 : index
    %c0_11 = arith.constant 0 : index
    %11 = vector.load %arg4[%c0_10, %c0_11] : memref<1x128xf32, #tpu.memory_space<vmem>>, vector<1x128xf32>
    %12 = vector.broadcast %11 : vector<1x128xf32> to vector<8x128xf32>
    %13 = arith.addf %10, %12 : vector<8x128xf32>
    %14 = vector.extract_strided_slice %13 {offsets = [0, 0], sizes = [8, 64], strides = [1, 1]} : vector<8x128xf32> to vector<8x64xf32>
    %15 = arith.truncf %14 : vector<8x64xf32> to vector<8x64xbf16>
    %16 = vector.extract_strided_slice %13 {offsets = [0, 64], sizes = [8, 64], strides = [1, 1]} : vector<8x128xf32> to vector<8x64xf32>
    %17 = arith.truncf %16 : vector<8x64xf32> to vector<8x64xbf16>
    %c0_12 = arith.constant 0 : index
    %c0_13 = arith.constant 0 : index
    %18 = vector.load %arg5[%c0_12, %c0_13] : memref<64x192xbf16, #tpu.memory_space<vmem>>, vector<64x192xbf16>
    %cst_14 = arith.constant dense<0.000000e+00> : vector<8x192xf32>
    %19 = tpu.matmul %15, %18, %cst_14 {dimension_numbers = #tpu.dot_dimension_numbers<[1], [0], [0], [1], [0, 0, 1, 1], [], []>} : vector<8x64xbf16>, vector<64x192xbf16>, vector<8x192xf32> -> vector<8x192xf32>
    %c0_15 = arith.constant 0 : index
    %c0_16 = arith.constant 0 : index
    %20 = vector.load %arg6[%c0_15, %c0_16] : memref<1x192xf32, #tpu.memory_space<vmem>>, vector<1x192xf32>
    %21 = vector.broadcast %20 : vector<1x192xf32> to vector<8x192xf32>
    %22 = arith.addf %19, %21 : vector<8x192xf32>
    %c0_17 = arith.constant 0 : index
    %c0_18 = arith.constant 0 : index
    %23 = vector.load %arg7[%c0_17, %c0_18] : memref<64x192xbf16, #tpu.memory_space<vmem>>, vector<64x192xbf16>
    %cst_19 = arith.constant dense<0.000000e+00> : vector<8x192xf32>
    %24 = tpu.matmul %17, %23, %cst_19 {dimension_numbers = #tpu.dot_dimension_numbers<[1], [0], [0], [1], [0, 0, 1, 1], [], []>} : vector<8x64xbf16>, vector<64x192xbf16>, vector<8x192xf32> -> vector<8x192xf32>
    %c0_20 = arith.constant 0 : index
    %c0_21 = arith.constant 0 : index
    %25 = vector.load %arg8[%c0_20, %c0_21] : memref<1x192xf32, #tpu.memory_space<vmem>>, vector<1x192xf32>
    %26 = vector.broadcast %25 : vector<1x192xf32> to vector<8x192xf32>
    %27 = arith.addf %24, %26 : vector<8x192xf32>
    %28 = vector.extract_strided_slice %22 {offsets = [0, 0], sizes = [8, 64], strides = [1, 1]} : vector<8x192xf32> to vector<8x64xf32>
    %29 = arith.truncf %28 : vector<8x64xf32> to vector<8x64xbf16>
    %30 = vector.extract_strided_slice %22 {offsets = [0, 64], sizes = [8, 64], strides = [1, 1]} : vector<8x192xf32> to vector<8x64xf32>
    %31 = arith.truncf %30 : vector<8x64xf32> to vector<8x64xbf16>
    %32 = vector.extract_strided_slice %22 {offsets = [0, 128], sizes = [8, 64], strides = [1, 1]} : vector<8x192xf32> to vector<8x64xf32>
    %33 = arith.truncf %32 : vector<8x64xf32> to vector<8x64xbf16>
    %34 = vector.extract_strided_slice %27 {offsets = [0, 0], sizes = [8, 64], strides = [1, 1]} : vector<8x192xf32> to vector<8x64xf32>
    %35 = arith.truncf %34 : vector<8x64xf32> to vector<8x64xbf16>
    %36 = vector.extract_strided_slice %27 {offsets = [0, 64], sizes = [8, 64], strides = [1, 1]} : vector<8x192xf32> to vector<8x64xf32>
    %37 = arith.truncf %36 : vector<8x64xf32> to vector<8x64xbf16>
    %38 = vector.extract_strided_slice %27 {offsets = [0, 128], sizes = [8, 64], strides = [1, 1]} : vector<8x192xf32> to vector<8x64xf32>
    %39 = arith.truncf %38 : vector<8x64xf32> to vector<8x64xbf16>
    %40 = vector.shape_cast %5 : vector<1x1x8xf32> to vector<1x8xf32>
    %41 = vector.shape_cast %40 : vector<1x8xf32> to vector<1x8xf32>
    %42 = vector.broadcast %41 : vector<1x8xf32> to vector<8x8xf32>
    %43 = vector.extract_strided_slice %29 {offsets = [0, 0], sizes = [8, 8], strides = [1, 1]} : vector<8x64xbf16> to vector<8x8xbf16>
    %44 = vector.extract_strided_slice %37 {offsets = [0, 0], sizes = [8, 8], strides = [1, 1]} : vector<8x64xbf16> to vector<8x8xbf16>
    %cst_22 = arith.constant dense<0.000000e+00> : vector<8x8xf32>
    %45 = tpu.matmul %43, %44, %cst_22 {dimension_numbers = #tpu.dot_dimension_numbers<[1], [1], [0], [0], [0, 0, 1, 0], [], []>} : vector<8x8xbf16>, vector<8x8xbf16>, vector<8x8xf32> -> vector<8x8xf32>
    %46 = arith.addf %45, %42 : vector<8x8xf32>
    %cst_23 = arith.constant dense<0xFF800000> : vector<8xf32>
    %47 = vector.multi_reduction <maximumf>, %46, %cst_23 [1] : vector<8x8xf32> to vector<8xf32>
    %48 = vector.shape_cast %47 : vector<8xf32> to vector<8x1xf32>
    %49 = vector.broadcast %48 : vector<8x1xf32> to vector<8x8xf32>
    %50 = arith.subf %46, %49 : vector<8x8xf32>
    %51 = math.exp %50 : vector<8x8xf32>
    %cst_24 = arith.constant dense<0.000000e+00> : vector<8xf32>
    %52 = vector.multi_reduction <add>, %51, %cst_24 [1] : vector<8x8xf32> to vector<8xf32>
    %53 = vector.shape_cast %52 : vector<8xf32> to vector<8x1xf32>
    %54 = arith.truncf %51 : vector<8x8xf32> to vector<8x8xbf16>
    %55 = vector.extract_strided_slice %39 {offsets = [0, 0], sizes = [8, 8], strides = [1, 1]} : vector<8x64xbf16> to vector<8x8xbf16>
    %cst_25 = arith.constant dense<0.000000e+00> : vector<8x8xf32>
    %56 = tpu.matmul %54, %55, %cst_25 {dimension_numbers = #tpu.dot_dimension_numbers<[1], [0], [0], [1], [0, 0, 1, 1], [], []>} : vector<8x8xbf16>, vector<8x8xbf16>, vector<8x8xf32> -> vector<8x8xf32>
    %57 = tpu.reciprocal %53 {approx = true} : vector<8x1xf32> -> vector<8x1xf32>
    %58 = vector.broadcast %57 : vector<8x1xf32> to vector<8x8xf32>
    %59 = arith.mulf %56, %58 : vector<8x8xf32>
    %c0_26 = arith.constant 0 : index
    %c0_27 = arith.constant 0 : index
    %60 = vector.load %arg17[%c0_26, %c0_27] : memref<8x64xf32, #tpu.memory_space<vmem>>, vector<8x8xf32>
    tpu.vector_store %arg17[%c0_26, %c0_27], %59 {strides = array<i32>} : memref<8x64xf32, #tpu.memory_space<vmem>>, vector<8x8xf32>,
    %61 = vector.extract_strided_slice %29 {offsets = [0, 8], sizes = [8, 8], strides = [1, 1]} : vector<8x64xbf16> to vector<8x8xbf16>
    %62 = vector.extract_strided_slice %37 {offsets = [0, 8], sizes = [8, 8], strides = [1, 1]} : vector<8x64xbf16> to vector<8x8xbf16>
    %cst_28 = arith.constant dense<0.000000e+00> : vector<8x8xf32>
    %63 = tpu.matmul %61, %62, %cst_28 {dimension_numbers = #tpu.dot_dimension_numbers<[1], [1], [0], [0], [0, 0, 1, 0], [], []>} : vector<8x8xbf16>, vector<8x8xbf16>, vector<8x8xf32> -> vector<8x8xf32>
    %64 = arith.addf %63, %42 : vector<8x8xf32>
    %cst_29 = arith.constant dense<0xFF800000> : vector<8xf32>
    %65 = vector.multi_reduction <maximumf>, %64, %cst_29 [1] : vector<8x8xf32> to vector<8xf32>
    %66 = vector.shape_cast %65 : vector<8xf32> to vector<8x1xf32>
    %67 = vector.broadcast %66 : vector<8x1xf32> to vector<8x8xf32>
    %68 = arith.subf %64, %67 : vector<8x8xf32>
    %69 = math.exp %68 : vector<8x8xf32>
    %cst_30 = arith.constant dense<0.000000e+00> : vector<8xf32>
    %70 = vector.multi_reduction <add>, %69, %cst_30 [1] : vector<8x8xf32> to vector<8xf32>
    %71 = vector.shape_cast %70 : vector<8xf32> to vector<8x1xf32>
    %72 = arith.truncf %69 : vector<8x8xf32> to vector<8x8xbf16>
    %73 = vector.extract_strided_slice %39 {offsets = [0, 8], sizes = [8, 8], strides = [1, 1]} : vector<8x64xbf16> to vector<8x8xbf16>
    %cst_31 = arith.constant dense<0.000000e+00> : vector<8x8xf32>
    %74 = tpu.matmul %72, %73, %cst_31 {dimension_numbers = #tpu.dot_dimension_numbers<[1], [0], [0], [1], [0, 0, 1, 1], [], []>} : vector<8x8xbf16>, vector<8x8xbf16>, vector<8x8xf32> -> vector<8x8xf32>
    %75 = tpu.reciprocal %71 {approx = true} : vector<8x1xf32> -> vector<8x1xf32>
    %76 = vector.broadcast %75 : vector<8x1xf32> to vector<8x8xf32>
    %77 = arith.mulf %74, %76 : vector<8x8xf32>
    %c0_32 = arith.constant 0 : index
    %c8 = arith.constant 8 : index
    %78 = vector.load %arg17[%c0_32, %c8] : memref<8x64xf32, #tpu.memory_space<vmem>>, vector<8x8xf32>
    tpu.vector_store %arg17[%c0_32, %c8], %77 {strides = array<i32>} : memref<8x64xf32, #tpu.memory_space<vmem>>, vector<8x8xf32>,
    %79 = vector.extract_strided_slice %29 {offsets = [0, 16], sizes = [8, 8], strides = [1, 1]} : vector<8x64xbf16> to vector<8x8xbf16>
    %80 = vector.extract_strided_slice %37 {offsets = [0, 16], sizes = [8, 8], strides = [1, 1]} : vector<8x64xbf16> to vector<8x8xbf16>
    %cst_33 = arith.constant dense<0.000000e+00> : vector<8x8xf32>
    %81 = tpu.matmul %79, %80, %cst_33 {dimension_numbers = #tpu.dot_dimension_numbers<[1], [1], [0], [0], [0, 0, 1, 0], [], []>} : vector<8x8xbf16>, vector<8x8xbf16>, vector<8x8xf32> -> vector<8x8xf32>
    %82 = arith.addf %81, %42 : vector<8x8xf32>
    %cst_34 = arith.constant dense<0xFF800000> : vector<8xf32>
    %83 = vector.multi_reduction <maximumf>, %82, %cst_34 [1] : vector<8x8xf32> to vector<8xf32>
    %84 = vector.shape_cast %83 : vector<8xf32> to vector<8x1xf32>
    %85 = vector.broadcast %84 : vector<8x1xf32> to vector<8x8xf32>
    %86 = arith.subf %82, %85 : vector<8x8xf32>
    %87 = math.exp %86 : vector<8x8xf32>
    %cst_35 = arith.constant dense<0.000000e+00> : vector<8xf32>
    %88 = vector.multi_reduction <add>, %87, %cst_35 [1] : vector<8x8xf32> to vector<8xf32>
    %89 = vector.shape_cast %88 : vector<8xf32> to vector<8x1xf32>
    %90 = arith.truncf %87 : vector<8x8xf32> to vector<8x8xbf16>
    %91 = vector.extract_strided_slice %39 {offsets = [0, 16], sizes = [8, 8], strides = [1, 1]} : vector<8x64xbf16> to vector<8x8xbf16>
    %cst_36 = arith.constant dense<0.000000e+00> : vector<8x8xf32>
    %92 = tpu.matmul %90, %91, %cst_36 {dimension_numbers = #tpu.dot_dimension_numbers<[1], [0], [0], [1], [0, 0, 1, 1], [], []>} : vector<8x8xbf16>, vector<8x8xbf16>, vector<8x8xf32> -> vector<8x8xf32>
    %93 = tpu.reciprocal %89 {approx = true} : vector<8x1xf32> -> vector<8x1xf32>
    %94 = vector.broadcast %93 : vector<8x1xf32> to vector<8x8xf32>
    %95 = arith.mulf %92, %94 : vector<8x8xf32>
    %c0_37 = arith.constant 0 : index
    %c16 = arith.constant 16 : index
    %96 = vector.load %arg17[%c0_37, %c16] : memref<8x64xf32, #tpu.memory_space<vmem>>, vector<8x8xf32>
    tpu.vector_store %arg17[%c0_37, %c16], %95 {strides = array<i32>} : memref<8x64xf32, #tpu.memory_space<vmem>>, vector<8x8xf32>,
    %97 = vector.extract_strided_slice %29 {offsets = [0, 24], sizes = [8, 8], strides = [1, 1]} : vector<8x64xbf16> to vector<8x8xbf16>
    %98 = vector.extract_strided_slice %37 {offsets = [0, 24], sizes = [8, 8], strides = [1, 1]} : vector<8x64xbf16> to vector<8x8xbf16>
    %cst_38 = arith.constant dense<0.000000e+00> : vector<8x8xf32>
    %99 = tpu.matmul %97, %98, %cst_38 {dimension_numbers = #tpu.dot_dimension_numbers<[1], [1], [0], [0], [0, 0, 1, 0], [], []>} : vector<8x8xbf16>, vector<8x8xbf16>, vector<8x8xf32> -> vector<8x8xf32>
    %100 = arith.addf %99, %42 : vector<8x8xf32>
    %cst_39 = arith.constant dense<0xFF800000> : vector<8xf32>
    %101 = vector.multi_reduction <maximumf>, %100, %cst_39 [1] : vector<8x8xf32> to vector<8xf32>
    %102 = vector.shape_cast %101 : vector<8xf32> to vector<8x1xf32>
    %103 = vector.broadcast %102 : vector<8x1xf32> to vector<8x8xf32>
    %104 = arith.subf %100, %103 : vector<8x8xf32>
    %105 = math.exp %104 : vector<8x8xf32>
    %cst_40 = arith.constant dense<0.000000e+00> : vector<8xf32>
    %106 = vector.multi_reduction <add>, %105, %cst_40 [1] : vector<8x8xf32> to vector<8xf32>
    %107 = vector.shape_cast %106 : vector<8xf32> to vector<8x1xf32>
    %108 = arith.truncf %105 : vector<8x8xf32> to vector<8x8xbf16>
    %109 = vector.extract_strided_slice %39 {offsets = [0, 24], sizes = [8, 8], strides = [1, 1]} : vector<8x64xbf16> to vector<8x8xbf16>
    %cst_41 = arith.constant dense<0.000000e+00> : vector<8x8xf32>
    %110 = tpu.matmul %108, %109, %cst_41 {dimension_numbers = #tpu.dot_dimension_numbers<[1], [0], [0], [1], [0, 0, 1, 1], [], []>} : vector<8x8xbf16>, vector<8x8xbf16>, vector<8x8xf32> -> vector<8x8xf32>
    %111 = tpu.reciprocal %107 {approx = true} : vector<8x1xf32> -> vector<8x1xf32>
    %112 = vector.broadcast %111 : vector<8x1xf32> to vector<8x8xf32>
    %113 = arith.mulf %110, %112 : vector<8x8xf32>
    %c0_42 = arith.constant 0 : index
    %c24 = arith.constant 24 : index
    %114 = vector.load %arg17[%c0_42, %c24] : memref<8x64xf32, #tpu.memory_space<vmem>>, vector<8x8xf32>
    tpu.vector_store %arg17[%c0_42, %c24], %113 {strides = array<i32>} : memref<8x64xf32, #tpu.memory_space<vmem>>, vector<8x8xf32>,
    %115 = vector.extract_strided_slice %29 {offsets = [0, 32], sizes = [8, 8], strides = [1, 1]} : vector<8x64xbf16> to vector<8x8xbf16>
    %116 = vector.extract_strided_slice %37 {offsets = [0, 32], sizes = [8, 8], strides = [1, 1]} : vector<8x64xbf16> to vector<8x8xbf16>
    %cst_43 = arith.constant dense<0.000000e+00> : vector<8x8xf32>
    %117 = tpu.matmul %115, %116, %cst_43 {dimension_numbers = #tpu.dot_dimension_numbers<[1], [1], [0], [0], [0, 0, 1, 0], [], []>} : vector<8x8xbf16>, vector<8x8xbf16>, vector<8x8xf32> -> vector<8x8xf32>
    %118 = arith.addf %117, %42 : vector<8x8xf32>
    %cst_44 = arith.constant dense<0xFF800000> : vector<8xf32>
    %119 = vector.multi_reduction <maximumf>, %118, %cst_44 [1] : vector<8x8xf32> to vector<8xf32>
    %120 = vector.shape_cast %119 : vector<8xf32> to vector<8x1xf32>
    %121 = vector.broadcast %120 : vector<8x1xf32> to vector<8x8xf32>
    %122 = arith.subf %118, %121 : vector<8x8xf32>
    %123 = math.exp %122 : vector<8x8xf32>
    %cst_45 = arith.constant dense<0.000000e+00> : vector<8xf32>
    %124 = vector.multi_reduction <add>, %123, %cst_45 [1] : vector<8x8xf32> to vector<8xf32>
    %125 = vector.shape_cast %124 : vector<8xf32> to vector<8x1xf32>
    %126 = arith.truncf %123 : vector<8x8xf32> to vector<8x8xbf16>
    %127 = vector.extract_strided_slice %39 {offsets = [0, 32], sizes = [8, 8], strides = [1, 1]} : vector<8x64xbf16> to vector<8x8xbf16>
    %cst_46 = arith.constant dense<0.000000e+00> : vector<8x8xf32>
    %128 = tpu.matmul %126, %127, %cst_46 {dimension_numbers = #tpu.dot_dimension_numbers<[1], [0], [0], [1], [0, 0, 1, 1], [], []>} : vector<8x8xbf16>, vector<8x8xbf16>, vector<8x8xf32> -> vector<8x8xf32>
    %129 = tpu.reciprocal %125 {approx = true} : vector<8x1xf32> -> vector<8x1xf32>
    %130 = vector.broadcast %129 : vector<8x1xf32> to vector<8x8xf32>
    %131 = arith.mulf %128, %130 : vector<8x8xf32>
    %c0_47 = arith.constant 0 : index
    %c32 = arith.constant 32 : index
    %132 = vector.load %arg17[%c0_47, %c32] : memref<8x64xf32, #tpu.memory_space<vmem>>, vector<8x8xf32>
    tpu.vector_store %arg17[%c0_47, %c32], %131 {strides = array<i32>} : memref<8x64xf32, #tpu.memory_space<vmem>>, vector<8x8xf32>,
    %133 = vector.extract_strided_slice %29 {offsets = [0, 40], sizes = [8, 8], strides = [1, 1]} : vector<8x64xbf16> to vector<8x8xbf16>
    %134 = vector.extract_strided_slice %37 {offsets = [0, 40], sizes = [8, 8], strides = [1, 1]} : vector<8x64xbf16> to vector<8x8xbf16>
    %cst_48 = arith.constant dense<0.000000e+00> : vector<8x8xf32>
    %135 = tpu.matmul %133, %134, %cst_48 {dimension_numbers = #tpu.dot_dimension_numbers<[1], [1], [0], [0], [0, 0, 1, 0], [], []>} : vector<8x8xbf16>, vector<8x8xbf16>, vector<8x8xf32> -> vector<8x8xf32>
    %136 = arith.addf %135, %42 : vector<8x8xf32>
    %cst_49 = arith.constant dense<0xFF800000> : vector<8xf32>
    %137 = vector.multi_reduction <maximumf>, %136, %cst_49 [1] : vector<8x8xf32> to vector<8xf32>
    %138 = vector.shape_cast %137 : vector<8xf32> to vector<8x1xf32>
    %139 = vector.broadcast %138 : vector<8x1xf32> to vector<8x8xf32>
    %140 = arith.subf %136, %139 : vector<8x8xf32>
    %141 = math.exp %140 : vector<8x8xf32>
    %cst_50 = arith.constant dense<0.000000e+00> : vector<8xf32>
    %142 = vector.multi_reduction <add>, %141, %cst_50 [1] : vector<8x8xf32> to vector<8xf32>
    %143 = vector.shape_cast %142 : vector<8xf32> to vector<8x1xf32>
    %144 = arith.truncf %141 : vector<8x8xf32> to vector<8x8xbf16>
    %145 = vector.extract_strided_slice %39 {offsets = [0, 40], sizes = [8, 8], strides = [1, 1]} : vector<8x64xbf16> to vector<8x8xbf16>
    %cst_51 = arith.constant dense<0.000000e+00> : vector<8x8xf32>
    %146 = tpu.matmul %144, %145, %cst_51 {dimension_numbers = #tpu.dot_dimension_numbers<[1], [0], [0], [1], [0, 0, 1, 1], [], []>} : vector<8x8xbf16>, vector<8x8xbf16>, vector<8x8xf32> -> vector<8x8xf32>
    %147 = tpu.reciprocal %143 {approx = true} : vector<8x1xf32> -> vector<8x1xf32>
    %148 = vector.broadcast %147 : vector<8x1xf32> to vector<8x8xf32>
    %149 = arith.mulf %146, %148 : vector<8x8xf32>
    %c0_52 = arith.constant 0 : index
    %c40 = arith.constant 40 : index
    %150 = vector.load %arg17[%c0_52, %c40] : memref<8x64xf32, #tpu.memory_space<vmem>>, vector<8x8xf32>
    tpu.vector_store %arg17[%c0_52, %c40], %149 {strides = array<i32>} : memref<8x64xf32, #tpu.memory_space<vmem>>, vector<8x8xf32>,
    %151 = vector.extract_strided_slice %29 {offsets = [0, 48], sizes = [8, 8], strides = [1, 1]} : vector<8x64xbf16> to vector<8x8xbf16>
    %152 = vector.extract_strided_slice %37 {offsets = [0, 48], sizes = [8, 8], strides = [1, 1]} : vector<8x64xbf16> to vector<8x8xbf16>
    %cst_53 = arith.constant dense<0.000000e+00> : vector<8x8xf32>
    %153 = tpu.matmul %151, %152, %cst_53 {dimension_numbers = #tpu.dot_dimension_numbers<[1], [1], [0], [0], [0, 0, 1, 0], [], []>} : vector<8x8xbf16>, vector<8x8xbf16>, vector<8x8xf32> -> vector<8x8xf32>
    %154 = arith.addf %153, %42 : vector<8x8xf32>
    %cst_54 = arith.constant dense<0xFF800000> : vector<8xf32>
    %155 = vector.multi_reduction <maximumf>, %154, %cst_54 [1] : vector<8x8xf32> to vector<8xf32>
    %156 = vector.shape_cast %155 : vector<8xf32> to vector<8x1xf32>
    %157 = vector.broadcast %156 : vector<8x1xf32> to vector<8x8xf32>
    %158 = arith.subf %154, %157 : vector<8x8xf32>
    %159 = math.exp %158 : vector<8x8xf32>
    %cst_55 = arith.constant dense<0.000000e+00> : vector<8xf32>
    %160 = vector.multi_reduction <add>, %159, %cst_55 [1] : vector<8x8xf32> to vector<8xf32>
    %161 = vector.shape_cast %160 : vector<8xf32> to vector<8x1xf32>
    %162 = arith.truncf %159 : vector<8x8xf32> to vector<8x8xbf16>
    %163 = vector.extract_strided_slice %39 {offsets = [0, 48], sizes = [8, 8], strides = [1, 1]} : vector<8x64xbf16> to vector<8x8xbf16>
    %cst_56 = arith.constant dense<0.000000e+00> : vector<8x8xf32>
    %164 = tpu.matmul %162, %163, %cst_56 {dimension_numbers = #tpu.dot_dimension_numbers<[1], [0], [0], [1], [0, 0, 1, 1], [], []>} : vector<8x8xbf16>, vector<8x8xbf16>, vector<8x8xf32> -> vector<8x8xf32>
    %165 = tpu.reciprocal %161 {approx = true} : vector<8x1xf32> -> vector<8x1xf32>
    %166 = vector.broadcast %165 : vector<8x1xf32> to vector<8x8xf32>
    %167 = arith.mulf %164, %166 : vector<8x8xf32>
    %c0_57 = arith.constant 0 : index
    %c48 = arith.constant 48 : index
    %168 = vector.load %arg17[%c0_57, %c48] : memref<8x64xf32, #tpu.memory_space<vmem>>, vector<8x8xf32>
    tpu.vector_store %arg17[%c0_57, %c48], %167 {strides = array<i32>} : memref<8x64xf32, #tpu.memory_space<vmem>>, vector<8x8xf32>,
    %169 = vector.extract_strided_slice %29 {offsets = [0, 56], sizes = [8, 8], strides = [1, 1]} : vector<8x64xbf16> to vector<8x8xbf16>
    %170 = vector.extract_strided_slice %37 {offsets = [0, 56], sizes = [8, 8], strides = [1, 1]} : vector<8x64xbf16> to vector<8x8xbf16>
    %cst_58 = arith.constant dense<0.000000e+00> : vector<8x8xf32>
    %171 = tpu.matmul %169, %170, %cst_58 {dimension_numbers = #tpu.dot_dimension_numbers<[1], [1], [0], [0], [0, 0, 1, 0], [], []>} : vector<8x8xbf16>, vector<8x8xbf16>, vector<8x8xf32> -> vector<8x8xf32>
    %172 = arith.addf %171, %42 : vector<8x8xf32>
    %cst_59 = arith.constant dense<0xFF800000> : vector<8xf32>
    %173 = vector.multi_reduction <maximumf>, %172, %cst_59 [1] : vector<8x8xf32> to vector<8xf32>
    %174 = vector.shape_cast %173 : vector<8xf32> to vector<8x1xf32>
    %175 = vector.broadcast %174 : vector<8x1xf32> to vector<8x8xf32>
    %176 = arith.subf %172, %175 : vector<8x8xf32>
    %177 = math.exp %176 : vector<8x8xf32>
    %cst_60 = arith.constant dense<0.000000e+00> : vector<8xf32>
    %178 = vector.multi_reduction <add>, %177, %cst_60 [1] : vector<8x8xf32> to vector<8xf32>
    %179 = vector.shape_cast %178 : vector<8xf32> to vector<8x1xf32>
    %180 = arith.truncf %177 : vector<8x8xf32> to vector<8x8xbf16>
    %181 = vector.extract_strided_slice %39 {offsets = [0, 56], sizes = [8, 8], strides = [1, 1]} : vector<8x64xbf16> to vector<8x8xbf16>
    %cst_61 = arith.constant dense<0.000000e+00> : vector<8x8xf32>
    %182 = tpu.matmul %180, %181, %cst_61 {dimension_numbers = #tpu.dot_dimension_numbers<[1], [0], [0], [1], [0, 0, 1, 1], [], []>} : vector<8x8xbf16>, vector<8x8xbf16>, vector<8x8xf32> -> vector<8x8xf32>
    %183 = tpu.reciprocal %179 {approx = true} : vector<8x1xf32> -> vector<8x1xf32>
    %184 = vector.broadcast %183 : vector<8x1xf32> to vector<8x8xf32>
    %185 = arith.mulf %182, %184 : vector<8x8xf32>
    %c0_62 = arith.constant 0 : index
    %c56 = arith.constant 56 : index
    %186 = vector.load %arg17[%c0_62, %c56] : memref<8x64xf32, #tpu.memory_space<vmem>>, vector<8x8xf32>
    tpu.vector_store %arg17[%c0_62, %c56], %185 {strides = array<i32>} : memref<8x64xf32, #tpu.memory_space<vmem>>, vector<8x8xf32>,
    %c0_63 = arith.constant 0 : index
    %c0_64 = arith.constant 0 : index
    %187 = vector.load %arg17[%c0_63, %c0_64] : memref<8x64xf32, #tpu.memory_space<vmem>>, vector<8x64xf32>
    %188 = arith.truncf %187 : vector<8x64xf32> to vector<8x64xbf16>
    %c0_65 = arith.constant 0 : index
    %c0_66 = arith.constant 0 : index
    %189 = vector.load %arg9[%c0_65, %c0_66] : memref<64x64xbf16, #tpu.memory_space<vmem>>, vector<64x64xbf16>
    %cst_67 = arith.constant dense<0.000000e+00> : vector<8x64xf32>
    %190 = tpu.matmul %188, %189, %cst_67 {dimension_numbers = #tpu.dot_dimension_numbers<[1], [0], [0], [1], [0, 0, 1, 1], [], []>} : vector<8x64xbf16>, vector<64x64xbf16>, vector<8x64xf32> -> vector<8x64xf32>
    %c0_68 = arith.constant 0 : index
    %c0_69 = arith.constant 0 : index
    %191 = vector.load %arg10[%c0_68, %c0_69] : memref<1x64xf32, #tpu.memory_space<vmem>>, vector<1x64xf32>
    %192 = vector.broadcast %191 : vector<1x64xf32> to vector<8x64xf32>
    %193 = arith.addf %190, %192 : vector<8x64xf32>
    %194 = vector.shape_cast %5 : vector<1x1x8xf32> to vector<1x8xf32>
    %195 = vector.shape_cast %194 : vector<1x8xf32> to vector<1x8xf32>
    %196 = vector.broadcast %195 : vector<1x8xf32> to vector<8x8xf32>
    %197 = vector.extract_strided_slice %35 {offsets = [0, 0], sizes = [8, 8], strides = [1, 1]} : vector<8x64xbf16> to vector<8x8xbf16>
    %198 = vector.extract_strided_slice %31 {offsets = [0, 0], sizes = [8, 8], strides = [1, 1]} : vector<8x64xbf16> to vector<8x8xbf16>
    %cst_70 = arith.constant dense<0.000000e+00> : vector<8x8xf32>
    %199 = tpu.matmul %197, %198, %cst_70 {dimension_numbers = #tpu.dot_dimension_numbers<[1], [1], [0], [0], [0, 0, 1, 0], [], []>} : vector<8x8xbf16>, vector<8x8xbf16>, vector<8x8xf32> -> vector<8x8xf32>
    %200 = arith.addf %199, %196 : vector<8x8xf32>
    %cst_71 = arith.constant dense<0xFF800000> : vector<8xf32>
    %201 = vector.multi_reduction <maximumf>, %200, %cst_71 [1] : vector<8x8xf32> to vector<8xf32>
    %202 = vector.shape_cast %201 : vector<8xf32> to vector<8x1xf32>
    %203 = vector.broadcast %202 : vector<8x1xf32> to vector<8x8xf32>
    %204 = arith.subf %200, %203 : vector<8x8xf32>
    %205 = math.exp %204 : vector<8x8xf32>
    %cst_72 = arith.constant dense<0.000000e+00> : vector<8xf32>
    %206 = vector.multi_reduction <add>, %205, %cst_72 [1] : vector<8x8xf32> to vector<8xf32>
    %207 = vector.shape_cast %206 : vector<8xf32> to vector<8x1xf32>
    %208 = arith.truncf %205 : vector<8x8xf32> to vector<8x8xbf16>
    %209 = vector.extract_strided_slice %33 {offsets = [0, 0], sizes = [8, 8], strides = [1, 1]} : vector<8x64xbf16> to vector<8x8xbf16>
    %cst_73 = arith.constant dense<0.000000e+00> : vector<8x8xf32>
    %210 = tpu.matmul %208, %209, %cst_73 {dimension_numbers = #tpu.dot_dimension_numbers<[1], [0], [0], [1], [0, 0, 1, 1], [], []>} : vector<8x8xbf16>, vector<8x8xbf16>, vector<8x8xf32> -> vector<8x8xf32>
    %211 = tpu.reciprocal %207 {approx = true} : vector<8x1xf32> -> vector<8x1xf32>
    %212 = vector.broadcast %211 : vector<8x1xf32> to vector<8x8xf32>
    %213 = arith.mulf %210, %212 : vector<8x8xf32>
    %c0_74 = arith.constant 0 : index
    %c0_75 = arith.constant 0 : index
    %214 = vector.load %arg17[%c0_74, %c0_75] : memref<8x64xf32, #tpu.memory_space<vmem>>, vector<8x8xf32>
    tpu.vector_store %arg17[%c0_74, %c0_75], %213 {strides = array<i32>} : memref<8x64xf32, #tpu.memory_space<vmem>>, vector<8x8xf32>,
    %215 = vector.extract_strided_slice %35 {offsets = [0, 8], sizes = [8, 8], strides = [1, 1]} : vector<8x64xbf16> to vector<8x8xbf16>
    %216 = vector.extract_strided_slice %31 {offsets = [0, 8], sizes = [8, 8], strides = [1, 1]} : vector<8x64xbf16> to vector<8x8xbf16>
    %cst_76 = arith.constant dense<0.000000e+00> : vector<8x8xf32>
    %217 = tpu.matmul %215, %216, %cst_76 {dimension_numbers = #tpu.dot_dimension_numbers<[1], [1], [0], [0], [0, 0, 1, 0], [], []>} : vector<8x8xbf16>, vector<8x8xbf16>, vector<8x8xf32> -> vector<8x8xf32>
    %218 = arith.addf %217, %196 : vector<8x8xf32>
    %cst_77 = arith.constant dense<0xFF800000> : vector<8xf32>
    %219 = vector.multi_reduction <maximumf>, %218, %cst_77 [1] : vector<8x8xf32> to vector<8xf32>
    %220 = vector.shape_cast %219 : vector<8xf32> to vector<8x1xf32>
    %221 = vector.broadcast %220 : vector<8x1xf32> to vector<8x8xf32>
    %222 = arith.subf %218, %221 : vector<8x8xf32>
    %223 = math.exp %222 : vector<8x8xf32>
    %cst_78 = arith.constant dense<0.000000e+00> : vector<8xf32>
    %224 = vector.multi_reduction <add>, %223, %cst_78 [1] : vector<8x8xf32> to vector<8xf32>
    %225 = vector.shape_cast %224 : vector<8xf32> to vector<8x1xf32>
    %226 = arith.truncf %223 : vector<8x8xf32> to vector<8x8xbf16>
    %227 = vector.extract_strided_slice %33 {offsets = [0, 8], sizes = [8, 8], strides = [1, 1]} : vector<8x64xbf16> to vector<8x8xbf16>
    %cst_79 = arith.constant dense<0.000000e+00> : vector<8x8xf32>
    %228 = tpu.matmul %226, %227, %cst_79 {dimension_numbers = #tpu.dot_dimension_numbers<[1], [0], [0], [1], [0, 0, 1, 1], [], []>} : vector<8x8xbf16>, vector<8x8xbf16>, vector<8x8xf32> -> vector<8x8xf32>
    %229 = tpu.reciprocal %225 {approx = true} : vector<8x1xf32> -> vector<8x1xf32>
    %230 = vector.broadcast %229 : vector<8x1xf32> to vector<8x8xf32>
    %231 = arith.mulf %228, %230 : vector<8x8xf32>
    %c0_80 = arith.constant 0 : index
    %c8_81 = arith.constant 8 : index
    %232 = vector.load %arg17[%c0_80, %c8_81] : memref<8x64xf32, #tpu.memory_space<vmem>>, vector<8x8xf32>
    tpu.vector_store %arg17[%c0_80, %c8_81], %231 {strides = array<i32>} : memref<8x64xf32, #tpu.memory_space<vmem>>, vector<8x8xf32>,
    %233 = vector.extract_strided_slice %35 {offsets = [0, 16], sizes = [8, 8], strides = [1, 1]} : vector<8x64xbf16> to vector<8x8xbf16>
    %234 = vector.extract_strided_slice %31 {offsets = [0, 16], sizes = [8, 8], strides = [1, 1]} : vector<8x64xbf16> to vector<8x8xbf16>
    %cst_82 = arith.constant dense<0.000000e+00> : vector<8x8xf32>
    %235 = tpu.matmul %233, %234, %cst_82 {dimension_numbers = #tpu.dot_dimension_numbers<[1], [1], [0], [0], [0, 0, 1, 0], [], []>} : vector<8x8xbf16>, vector<8x8xbf16>, vector<8x8xf32> -> vector<8x8xf32>
    %236 = arith.addf %235, %196 : vector<8x8xf32>
    %cst_83 = arith.constant dense<0xFF800000> : vector<8xf32>
    %237 = vector.multi_reduction <maximumf>, %236, %cst_83 [1] : vector<8x8xf32> to vector<8xf32>
    %238 = vector.shape_cast %237 : vector<8xf32> to vector<8x1xf32>
    %239 = vector.broadcast %238 : vector<8x1xf32> to vector<8x8xf32>
    %240 = arith.subf %236, %239 : vector<8x8xf32>
    %241 = math.exp %240 : vector<8x8xf32>
    %cst_84 = arith.constant dense<0.000000e+00> : vector<8xf32>
    %242 = vector.multi_reduction <add>, %241, %cst_84 [1] : vector<8x8xf32> to vector<8xf32>
    %243 = vector.shape_cast %242 : vector<8xf32> to vector<8x1xf32>
    %244 = arith.truncf %241 : vector<8x8xf32> to vector<8x8xbf16>
    %245 = vector.extract_strided_slice %33 {offsets = [0, 16], sizes = [8, 8], strides = [1, 1]} : vector<8x64xbf16> to vector<8x8xbf16>
    %cst_85 = arith.constant dense<0.000000e+00> : vector<8x8xf32>
    %246 = tpu.matmul %244, %245, %cst_85 {dimension_numbers = #tpu.dot_dimension_numbers<[1], [0], [0], [1], [0, 0, 1, 1], [], []>} : vector<8x8xbf16>, vector<8x8xbf16>, vector<8x8xf32> -> vector<8x8xf32>
    %247 = tpu.reciprocal %243 {approx = true} : vector<8x1xf32> -> vector<8x1xf32>
    %248 = vector.broadcast %247 : vector<8x1xf32> to vector<8x8xf32>
    %249 = arith.mulf %246, %248 : vector<8x8xf32>
    %c0_86 = arith.constant 0 : index
    %c16_87 = arith.constant 16 : index
    %250 = vector.load %arg17[%c0_86, %c16_87] : memref<8x64xf32, #tpu.memory_space<vmem>>, vector<8x8xf32>
    tpu.vector_store %arg17[%c0_86, %c16_87], %249 {strides = array<i32>} : memref<8x64xf32, #tpu.memory_space<vmem>>, vector<8x8xf32>,
    %251 = vector.extract_strided_slice %35 {offsets = [0, 24], sizes = [8, 8], strides = [1, 1]} : vector<8x64xbf16> to vector<8x8xbf16>
    %252 = vector.extract_strided_slice %31 {offsets = [0, 24], sizes = [8, 8], strides = [1, 1]} : vector<8x64xbf16> to vector<8x8xbf16>
    %cst_88 = arith.constant dense<0.000000e+00> : vector<8x8xf32>
    %253 = tpu.matmul %251, %252, %cst_88 {dimension_numbers = #tpu.dot_dimension_numbers<[1], [1], [0], [0], [0, 0, 1, 0], [], []>} : vector<8x8xbf16>, vector<8x8xbf16>, vector<8x8xf32> -> vector<8x8xf32>
    %254 = arith.addf %253, %196 : vector<8x8xf32>
    %cst_89 = arith.constant dense<0xFF800000> : vector<8xf32>
    %255 = vector.multi_reduction <maximumf>, %254, %cst_89 [1] : vector<8x8xf32> to vector<8xf32>
    %256 = vector.shape_cast %255 : vector<8xf32> to vector<8x1xf32>
    %257 = vector.broadcast %256 : vector<8x1xf32> to vector<8x8xf32>
    %258 = arith.subf %254, %257 : vector<8x8xf32>
    %259 = math.exp %258 : vector<8x8xf32>
    %cst_90 = arith.constant dense<0.000000e+00> : vector<8xf32>
    %260 = vector.multi_reduction <add>, %259, %cst_90 [1] : vector<8x8xf32> to vector<8xf32>
    %261 = vector.shape_cast %260 : vector<8xf32> to vector<8x1xf32>
    %262 = arith.truncf %259 : vector<8x8xf32> to vector<8x8xbf16>
    %263 = vector.extract_strided_slice %33 {offsets = [0, 24], sizes = [8, 8], strides = [1, 1]} : vector<8x64xbf16> to vector<8x8xbf16>
    %cst_91 = arith.constant dense<0.000000e+00> : vector<8x8xf32>
    %264 = tpu.matmul %262, %263, %cst_91 {dimension_numbers = #tpu.dot_dimension_numbers<[1], [0], [0], [1], [0, 0, 1, 1], [], []>} : vector<8x8xbf16>, vector<8x8xbf16>, vector<8x8xf32> -> vector<8x8xf32>
    %265 = tpu.reciprocal %261 {approx = true} : vector<8x1xf32> -> vector<8x1xf32>
    %266 = vector.broadcast %265 : vector<8x1xf32> to vector<8x8xf32>
    %267 = arith.mulf %264, %266 : vector<8x8xf32>
    %c0_92 = arith.constant 0 : index
    %c24_93 = arith.constant 24 : index
    %268 = vector.load %arg17[%c0_92, %c24_93] : memref<8x64xf32, #tpu.memory_space<vmem>>, vector<8x8xf32>
    tpu.vector_store %arg17[%c0_92, %c24_93], %267 {strides = array<i32>} : memref<8x64xf32, #tpu.memory_space<vmem>>, vector<8x8xf32>,
    %269 = vector.extract_strided_slice %35 {offsets = [0, 32], sizes = [8, 8], strides = [1, 1]} : vector<8x64xbf16> to vector<8x8xbf16>
    %270 = vector.extract_strided_slice %31 {offsets = [0, 32], sizes = [8, 8], strides = [1, 1]} : vector<8x64xbf16> to vector<8x8xbf16>
    %cst_94 = arith.constant dense<0.000000e+00> : vector<8x8xf32>
    %271 = tpu.matmul %269, %270, %cst_94 {dimension_numbers = #tpu.dot_dimension_numbers<[1], [1], [0], [0], [0, 0, 1, 0], [], []>} : vector<8x8xbf16>, vector<8x8xbf16>, vector<8x8xf32> -> vector<8x8xf32>
    %272 = arith.addf %271, %196 : vector<8x8xf32>
    %cst_95 = arith.constant dense<0xFF800000> : vector<8xf32>
    %273 = vector.multi_reduction <maximumf>, %272, %cst_95 [1] : vector<8x8xf32> to vector<8xf32>
    %274 = vector.shape_cast %273 : vector<8xf32> to vector<8x1xf32>
    %275 = vector.broadcast %274 : vector<8x1xf32> to vector<8x8xf32>
    %276 = arith.subf %272, %275 : vector<8x8xf32>
    %277 = math.exp %276 : vector<8x8xf32>
    %cst_96 = arith.constant dense<0.000000e+00> : vector<8xf32>
    %278 = vector.multi_reduction <add>, %277, %cst_96 [1] : vector<8x8xf32> to vector<8xf32>
    %279 = vector.shape_cast %278 : vector<8xf32> to vector<8x1xf32>
    %280 = arith.truncf %277 : vector<8x8xf32> to vector<8x8xbf16>
    %281 = vector.extract_strided_slice %33 {offsets = [0, 32], sizes = [8, 8], strides = [1, 1]} : vector<8x64xbf16> to vector<8x8xbf16>
    %cst_97 = arith.constant dense<0.000000e+00> : vector<8x8xf32>
    %282 = tpu.matmul %280, %281, %cst_97 {dimension_numbers = #tpu.dot_dimension_numbers<[1], [0], [0], [1], [0, 0, 1, 1], [], []>} : vector<8x8xbf16>, vector<8x8xbf16>, vector<8x8xf32> -> vector<8x8xf32>
    %283 = tpu.reciprocal %279 {approx = true} : vector<8x1xf32> -> vector<8x1xf32>
    %284 = vector.broadcast %283 : vector<8x1xf32> to vector<8x8xf32>
    %285 = arith.mulf %282, %284 : vector<8x8xf32>
    %c0_98 = arith.constant 0 : index
    %c32_99 = arith.constant 32 : index
    %286 = vector.load %arg17[%c0_98, %c32_99] : memref<8x64xf32, #tpu.memory_space<vmem>>, vector<8x8xf32>
    tpu.vector_store %arg17[%c0_98, %c32_99], %285 {strides = array<i32>} : memref<8x64xf32, #tpu.memory_space<vmem>>, vector<8x8xf32>,
    %287 = vector.extract_strided_slice %35 {offsets = [0, 40], sizes = [8, 8], strides = [1, 1]} : vector<8x64xbf16> to vector<8x8xbf16>
    %288 = vector.extract_strided_slice %31 {offsets = [0, 40], sizes = [8, 8], strides = [1, 1]} : vector<8x64xbf16> to vector<8x8xbf16>
    %cst_100 = arith.constant dense<0.000000e+00> : vector<8x8xf32>
    %289 = tpu.matmul %287, %288, %cst_100 {dimension_numbers = #tpu.dot_dimension_numbers<[1], [1], [0], [0], [0, 0, 1, 0], [], []>} : vector<8x8xbf16>, vector<8x8xbf16>, vector<8x8xf32> -> vector<8x8xf32>
    %290 = arith.addf %289, %196 : vector<8x8xf32>
    %cst_101 = arith.constant dense<0xFF800000> : vector<8xf32>
    %291 = vector.multi_reduction <maximumf>, %290, %cst_101 [1] : vector<8x8xf32> to vector<8xf32>
    %292 = vector.shape_cast %291 : vector<8xf32> to vector<8x1xf32>
    %293 = vector.broadcast %292 : vector<8x1xf32> to vector<8x8xf32>
    %294 = arith.subf %290, %293 : vector<8x8xf32>
    %295 = math.exp %294 : vector<8x8xf32>
    %cst_102 = arith.constant dense<0.000000e+00> : vector<8xf32>
    %296 = vector.multi_reduction <add>, %295, %cst_102 [1] : vector<8x8xf32> to vector<8xf32>
    %297 = vector.shape_cast %296 : vector<8xf32> to vector<8x1xf32>
    %298 = arith.truncf %295 : vector<8x8xf32> to vector<8x8xbf16>
    %299 = vector.extract_strided_slice %33 {offsets = [0, 40], sizes = [8, 8], strides = [1, 1]} : vector<8x64xbf16> to vector<8x8xbf16>
    %cst_103 = arith.constant dense<0.000000e+00> : vector<8x8xf32>
    %300 = tpu.matmul %298, %299, %cst_103 {dimension_numbers = #tpu.dot_dimension_numbers<[1], [0], [0], [1], [0, 0, 1, 1], [], []>} : vector<8x8xbf16>, vector<8x8xbf16>, vector<8x8xf32> -> vector<8x8xf32>
    %301 = tpu.reciprocal %297 {approx = true} : vector<8x1xf32> -> vector<8x1xf32>
    %302 = vector.broadcast %301 : vector<8x1xf32> to vector<8x8xf32>
    %303 = arith.mulf %300, %302 : vector<8x8xf32>
    %c0_104 = arith.constant 0 : index
    %c40_105 = arith.constant 40 : index
    %304 = vector.load %arg17[%c0_104, %c40_105] : memref<8x64xf32, #tpu.memory_space<vmem>>, vector<8x8xf32>
    tpu.vector_store %arg17[%c0_104, %c40_105], %303 {strides = array<i32>} : memref<8x64xf32, #tpu.memory_space<vmem>>, vector<8x8xf32>,
    %305 = vector.extract_strided_slice %35 {offsets = [0, 48], sizes = [8, 8], strides = [1, 1]} : vector<8x64xbf16> to vector<8x8xbf16>
    %306 = vector.extract_strided_slice %31 {offsets = [0, 48], sizes = [8, 8], strides = [1, 1]} : vector<8x64xbf16> to vector<8x8xbf16>
    %cst_106 = arith.constant dense<0.000000e+00> : vector<8x8xf32>
    %307 = tpu.matmul %305, %306, %cst_106 {dimension_numbers = #tpu.dot_dimension_numbers<[1], [1], [0], [0], [0, 0, 1, 0], [], []>} : vector<8x8xbf16>, vector<8x8xbf16>, vector<8x8xf32> -> vector<8x8xf32>
    %308 = arith.addf %307, %196 : vector<8x8xf32>
    %cst_107 = arith.constant dense<0xFF800000> : vector<8xf32>
    %309 = vector.multi_reduction <maximumf>, %308, %cst_107 [1] : vector<8x8xf32> to vector<8xf32>
    %310 = vector.shape_cast %309 : vector<8xf32> to vector<8x1xf32>
    %311 = vector.broadcast %310 : vector<8x1xf32> to vector<8x8xf32>
    %312 = arith.subf %308, %311 : vector<8x8xf32>
    %313 = math.exp %312 : vector<8x8xf32>
    %cst_108 = arith.constant dense<0.000000e+00> : vector<8xf32>
    %314 = vector.multi_reduction <add>, %313, %cst_108 [1] : vector<8x8xf32> to vector<8xf32>
    %315 = vector.shape_cast %314 : vector<8xf32> to vector<8x1xf32>
    %316 = arith.truncf %313 : vector<8x8xf32> to vector<8x8xbf16>
    %317 = vector.extract_strided_slice %33 {offsets = [0, 48], sizes = [8, 8], strides = [1, 1]} : vector<8x64xbf16> to vector<8x8xbf16>
    %cst_109 = arith.constant dense<0.000000e+00> : vector<8x8xf32>
    %318 = tpu.matmul %316, %317, %cst_109 {dimension_numbers = #tpu.dot_dimension_numbers<[1], [0], [0], [1], [0, 0, 1, 1], [], []>} : vector<8x8xbf16>, vector<8x8xbf16>, vector<8x8xf32> -> vector<8x8xf32>
    %319 = tpu.reciprocal %315 {approx = true} : vector<8x1xf32> -> vector<8x1xf32>
    %320 = vector.broadcast %319 : vector<8x1xf32> to vector<8x8xf32>
    %321 = arith.mulf %318, %320 : vector<8x8xf32>
    %c0_110 = arith.constant 0 : index
    %c48_111 = arith.constant 48 : index
    %322 = vector.load %arg17[%c0_110, %c48_111] : memref<8x64xf32, #tpu.memory_space<vmem>>, vector<8x8xf32>
    tpu.vector_store %arg17[%c0_110, %c48_111], %321 {strides = array<i32>} : memref<8x64xf32, #tpu.memory_space<vmem>>, vector<8x8xf32>,
    %323 = vector.extract_strided_slice %35 {offsets = [0, 56], sizes = [8, 8], strides = [1, 1]} : vector<8x64xbf16> to vector<8x8xbf16>
    %324 = vector.extract_strided_slice %31 {offsets = [0, 56], sizes = [8, 8], strides = [1, 1]} : vector<8x64xbf16> to vector<8x8xbf16>
    %cst_112 = arith.constant dense<0.000000e+00> : vector<8x8xf32>
    %325 = tpu.matmul %323, %324, %cst_112 {dimension_numbers = #tpu.dot_dimension_numbers<[1], [1], [0], [0], [0, 0, 1, 0], [], []>} : vector<8x8xbf16>, vector<8x8xbf16>, vector<8x8xf32> -> vector<8x8xf32>
    %326 = arith.addf %325, %196 : vector<8x8xf32>
    %cst_113 = arith.constant dense<0xFF800000> : vector<8xf32>
    %327 = vector.multi_reduction <maximumf>, %326, %cst_113 [1] : vector<8x8xf32> to vector<8xf32>
    %328 = vector.shape_cast %327 : vector<8xf32> to vector<8x1xf32>
    %329 = vector.broadcast %328 : vector<8x1xf32> to vector<8x8xf32>
    %330 = arith.subf %326, %329 : vector<8x8xf32>
    %331 = math.exp %330 : vector<8x8xf32>
    %cst_114 = arith.constant dense<0.000000e+00> : vector<8xf32>
    %332 = vector.multi_reduction <add>, %331, %cst_114 [1] : vector<8x8xf32> to vector<8xf32>
    %333 = vector.shape_cast %332 : vector<8xf32> to vector<8x1xf32>
    %334 = arith.truncf %331 : vector<8x8xf32> to vector<8x8xbf16>
    %335 = vector.extract_strided_slice %33 {offsets = [0, 56], sizes = [8, 8], strides = [1, 1]} : vector<8x64xbf16> to vector<8x8xbf16>
    %cst_115 = arith.constant dense<0.000000e+00> : vector<8x8xf32>
    %336 = tpu.matmul %334, %335, %cst_115 {dimension_numbers = #tpu.dot_dimension_numbers<[1], [0], [0], [1], [0, 0, 1, 1], [], []>} : vector<8x8xbf16>, vector<8x8xbf16>, vector<8x8xf32> -> vector<8x8xf32>
    %337 = tpu.reciprocal %333 {approx = true} : vector<8x1xf32> -> vector<8x1xf32>
    %338 = vector.broadcast %337 : vector<8x1xf32> to vector<8x8xf32>
    %339 = arith.mulf %336, %338 : vector<8x8xf32>
    %c0_116 = arith.constant 0 : index
    %c56_117 = arith.constant 56 : index
    %340 = vector.load %arg17[%c0_116, %c56_117] : memref<8x64xf32, #tpu.memory_space<vmem>>, vector<8x8xf32>
    tpu.vector_store %arg17[%c0_116, %c56_117], %339 {strides = array<i32>} : memref<8x64xf32, #tpu.memory_space<vmem>>, vector<8x8xf32>,
    %c0_118 = arith.constant 0 : index
    %c0_119 = arith.constant 0 : index
    %341 = vector.load %arg17[%c0_118, %c0_119] : memref<8x64xf32, #tpu.memory_space<vmem>>, vector<8x64xf32>
    %342 = arith.truncf %341 : vector<8x64xf32> to vector<8x64xbf16>
    %c0_120 = arith.constant 0 : index
    %c0_121 = arith.constant 0 : index
    %343 = vector.load %arg11[%c0_120, %c0_121] : memref<64x64xbf16, #tpu.memory_space<vmem>>, vector<64x64xbf16>
    %cst_122 = arith.constant dense<0.000000e+00> : vector<8x64xf32>
    %344 = tpu.matmul %342, %343, %cst_122 {dimension_numbers = #tpu.dot_dimension_numbers<[1], [0], [0], [1], [0, 0, 1, 1], [], []>} : vector<8x64xbf16>, vector<64x64xbf16>, vector<8x64xf32> -> vector<8x64xf32>
    %c0_123 = arith.constant 0 : index
    %c0_124 = arith.constant 0 : index
    %345 = vector.load %arg12[%c0_123, %c0_124] : memref<1x64xf32, #tpu.memory_space<vmem>>, vector<1x64xf32>
    %346 = vector.broadcast %345 : vector<1x64xf32> to vector<8x64xf32>
    %347 = arith.addf %344, %346 : vector<8x64xf32>
    %348 = arith.truncf %193 : vector<8x64xf32> to vector<8x64xbf16>
    %c0_125 = arith.constant 0 : index
    %c0_126 = arith.constant 0 : index
    %349 = vector.load %arg13[%c0_125, %c0_126] : memref<64x128xbf16, #tpu.memory_space<vmem>>, vector<64x128xbf16>
    %cst_127 = arith.constant dense<0.000000e+00> : vector<8x128xf32>
    %350 = tpu.matmul %348, %349, %cst_127 {dimension_numbers = #tpu.dot_dimension_numbers<[1], [0], [0], [1], [0, 0, 1, 1], [], []>} : vector<8x64xbf16>, vector<64x128xbf16>, vector<8x128xf32> -> vector<8x128xf32>
    %351 = arith.truncf %347 : vector<8x64xf32> to vector<8x64xbf16>
    %c0_128 = arith.constant 0 : index
    %c0_129 = arith.constant 0 : index
    %352 = vector.load %arg14[%c0_128, %c0_129] : memref<64x128xbf16, #tpu.memory_space<vmem>>, vector<64x128xbf16>
    %cst_130 = arith.constant dense<0.000000e+00> : vector<8x128xf32>
    %353 = tpu.matmul %351, %352, %cst_130 {dimension_numbers = #tpu.dot_dimension_numbers<[1], [0], [0], [1], [0, 0, 1, 1], [], []>} : vector<8x64xbf16>, vector<64x128xbf16>, vector<8x128xf32> -> vector<8x128xf32>
    %354 = arith.addf %350, %353 : vector<8x128xf32>
    %c0_131 = arith.constant 0 : index
    %c0_132 = arith.constant 0 : index
    %355 = vector.load %arg15[%c0_131, %c0_132] : memref<1x128xf32, #tpu.memory_space<vmem>>, vector<1x128xf32>
    %356 = vector.broadcast %355 : vector<1x128xf32> to vector<8x128xf32>
    %357 = arith.addf %354, %356 : vector<8x128xf32>
    %358 = vector.shape_cast %357 : vector<8x128xf32> to vector<1x8x128xf32>
    %c0_133 = arith.constant 0 : index
    %c0_134 = arith.constant 0 : index
    %c0_135 = arith.constant 0 : index
    %359 = vector.load %arg16[%c0_133, %c0_134, %c0_135] : memref<1x8x128xf32, #tpu.memory_space<vmem>>, vector<1x8x128xf32>
    tpu.vector_store %arg16[%c0_133, %c0_134, %c0_135], %358 {strides = array<i32>} : memref<1x8x128xf32, #tpu.memory_space<vmem>>, vector<1x8x128xf32>,
    return
  }
  func.func @transform_0(%arg0: i32) -> (i32, i32, i32) {
    %c0_i32 = arith.constant 0 : i32
    %c0_i32_0 = arith.constant 0 : i32
    %c0_i32_1 = arith.constant 0 : i32
    return %arg0, %c0_i32, %c0_i32_0 : i32, i32, i32
  }
  func.func @transform_1(%arg0: i32) -> (i32, i32, i32) {
    %c0_i32 = arith.constant 0 : i32
    %c0_i32_0 = arith.constant 0 : i32
    %c0_i32_1 = arith.constant 0 : i32
    return %arg0, %c0_i32, %c0_i32_0 : i32, i32, i32
  }
  func.func @transform_2(%arg0: i32) -> (i32, i32) {
    %c0_i32 = arith.constant 0 : i32
    %c0_i32_0 = arith.constant 0 : i32
    %c0_i32_1 = arith.constant 0 : i32
    return %c0_i32, %c0_i32_0 : i32, i32
  }
  func.func @transform_3(%arg0: i32) -> (i32, i32) {
    %c0_i32 = arith.constant 0 : i32
    %c0_i32_0 = arith.constant 0 : i32
    %c0_i32_1 = arith.constant 0 : i32
    return %c0_i32, %c0_i32_0 : i32, i32
  }
  func.func @transform_4(%arg0: i32) -> (i32, i32) {
    %c0_i32 = arith.constant 0 : i32
    %c0_i32_0 = arith.constant 0 : i32
    %c0_i32_1 = arith.constant 0 : i32
    return %c0_i32, %c0_i32_0 : i32, i32
  }
  func.func @transform_5(%arg0: i32) -> (i32, i32) {
    %c0_i32 = arith.constant 0 : i32
    %c0_i32_0 = arith.constant 0 : i32
    %c0_i32_1 = arith.constant 0 : i32
    return %c0_i32, %c0_i32_0 : i32, i32
  }
  func.func @transform_6(%arg0: i32) -> (i32, i32) {
    %c0_i32 = arith.constant 0 : i32
    %c0_i32_0 = arith.constant 0 : i32
    %c0_i32_1 = arith.constant 0 : i32
    return %c0_i32, %c0_i32_0 : i32, i32
  }
  func.func @transform_7(%arg0: i32) -> (i32, i32) {
    %c0_i32 = arith.constant 0 : i32
    %c0_i32_0 = arith.constant 0 : i32
    %c0_i32_1 = arith.constant 0 : i32
    return %c0_i32, %c0_i32_0 : i32, i32
  }
  func.func @transform_8(%arg0: i32) -> (i32, i32) {
    %c0_i32 = arith.constant 0 : i32
    %c0_i32_0 = arith.constant 0 : i32
    %c0_i32_1 = arith.constant 0 : i32
    return %c0_i32, %c0_i32_0 : i32, i32
  }
  func.func @transform_9(%arg0: i32) -> (i32, i32) {
    %c0_i32 = arith.constant 0 : i32
    %c0_i32_0 = arith.constant 0 : i32
    %c0_i32_1 = arith.constant 0 : i32
    return %c0_i32, %c0_i32_0 : i32, i32
  }
  func.func @transform_10(%arg0: i32) -> (i32, i32) {
    %c0_i32 = arith.constant 0 : i32
    %c0_i32_0 = arith.constant 0 : i32
    %c0_i32_1 = arith.constant 0 : i32
    return %c0_i32, %c0_i32_0 : i32, i32
  }
  func.func @transform_11(%arg0: i32) -> (i32, i32) {
    %c0_i32 = arith.constant 0 : i32
    %c0_i32_0 = arith.constant 0 : i32
    %c0_i32_1 = arith.constant 0 : i32
    return %c0_i32, %c0_i32_0 : i32, i32
  }
  func.func @transform_12(%arg0: i32) -> (i32, i32) {
    %c0_i32 = arith.constant 0 : i32
    %c0_i32_0 = arith.constant 0 : i32
    %c0_i32_1 = arith.constant 0 : i32
    return %c0_i32, %c0_i32_0 : i32, i32
  }
  func.func @transform_13(%arg0: i32) -> (i32, i32) {
    %c0_i32 = arith.constant 0 : i32
    %c0_i32_0 = arith.constant 0 : i32
    %c0_i32_1 = arith.constant 0 : i32
    return %c0_i32, %c0_i32_0 : i32, i32
  }
  func.func @transform_14(%arg0: i32) -> (i32, i32) {
    %c0_i32 = arith.constant 0 : i32
    %c0_i32_0 = arith.constant 0 : i32
    %c0_i32_1 = arith.constant 0 : i32
    return %c0_i32, %c0_i32_0 : i32, i32
  }
  func.func @transform_15(%arg0: i32) -> (i32, i32, i32) {
    %c0_i32 = arith.constant 0 : i32
    %c0_i32_0 = arith.constant 0 : i32
    %c0_i32_1 = arith.constant 0 : i32
    return %arg0, %c0_i32, %c0_i32_0 : i32, i32, i32
  }
}

</mosaic_0001>

<llo_original>
// kernel: tpu_custom_call.1
$region0: #{tpu_custom_call.1}
  #allocation0 [shape = 'u32[]', space=smem, size = 0x4, offset = 0x4, fixed_abs, tag = 'smem constant byte address 0x4 - core index']
  #allocation1 [shape = 'u32[72,128]{1,0:T(1,128)}', space=vmem, size = 0x9000, scoped, tag = 'internal scratch']
  #allocation2 [shape = 'f32[8,64]{1,0:T(8,128)}', space=vmem, size = 0x1000, scoped, tag = 'scratch operand']
  %s0 = inlined_call_operand.hbm [shape: f32[2,8,32], index: 0, kind: input, shape index: {}]
  %s1 = inlined_call_operand.hbm [shape: f32[2,1,8], index: 1, kind: input, shape index: {}]
  %s2 = inlined_call_operand.hbm [shape: bf16[32,128], index: 2, kind: input, shape index: {}]
  %s3 = inlined_call_operand.hbm [shape: f32[1,128], index: 3, kind: input, shape index: {}]
  %s4 = inlined_call_operand.hbm [shape: bf16[64,192], index: 4, kind: input, shape index: {}]
  %s5 = inlined_call_operand.vmem [shape: f32[1,192], index: 5, kind: input, shape index: {}]
  %s6 = inlined_call_operand.hbm [shape: bf16[64,192], index: 6, kind: input, shape index: {}]
  %s7 = inlined_call_operand.vmem [shape: f32[1,192], index: 7, kind: input, shape index: {}]
  %s8 = inlined_call_operand.hbm [shape: bf16[64,64], index: 8, kind: input, shape index: {}]
  %s9 = inlined_call_operand.vmem [shape: f32[1,64], index: 9, kind: input, shape index: {}]
  %s10 = inlined_call_operand.hbm [shape: bf16[64,64], index: 10, kind: input, shape index: {}]
  %s11 = inlined_call_operand.vmem [shape: f32[1,64], index: 11, kind: input, shape index: {}]
  %s12 = inlined_call_operand.hbm [shape: bf16[64,128], index: 12, kind: input, shape index: {}]
  %s13 = inlined_call_operand.hbm [shape: bf16[64,128], index: 13, kind: input, shape index: {}]
  %s14 = inlined_call_operand.vmem [shape: f32[1,128], index: 14, kind: input, shape index: {}]
  %s15 = inlined_call_operand.hbm [shape: f32[2,8,128], index: 15, kind: output, shape index: {}]
  %s16 = sld [smem:[#allocation0]]
  $region133: #{tpu_custom_call.1} parent=0
    _
  %s18 = ssub.s32 1, %s16
  %s19 = scalar_select 0, %s18, %s16
  $region1: #{tpu_custom_call.1} parent=0
    #allocation3 [shape = 'u8[8192]{0}', space=vmem, size = 0x2000, scoped, tag = 'input window, operand 0']
    #allocation4 [shape = 's32[2]{0}', space=sflag, size = 0x8, scoped, tag = 'scoped memory for tpu_custom_call.1']
    #allocation5 [shape = 's32[2]{0}', space=sflag, size = 0x8, scoped, tag = 'scoped memory for tpu_custom_call.1']
    #allocation6 [shape = 'u8[1024]{0}', space=vmem, size = 0x400, scoped, tag = 'input window, operand 1']
    #allocation7 [shape = 's32[2]{0}', space=sflag, size = 0x8, scoped, tag = 'scoped memory for tpu_custom_call.1']
    #allocation8 [shape = 'u8[8192]{0}', space=vmem, size = 0x2000, scoped, tag = 'input window, operand 2, single buffered']
    #allocation9 [shape = 'u8[512]{0}', space=vmem, size = 0x400, scoped, tag = 'input window, operand 3, single buffered']
    #allocation10 [shape = 's32[1]{0}', space=sflag, size = 0x4, scoped, tag = 'scoped memory for tpu_custom_call.1']
    #allocation11 [shape = 'u8[32768]{0}', space=vmem, size = 0x8000, scoped, tag = 'input window, operand 4, single buffered']
    #allocation12 [shape = 'u8[32768]{0}', space=vmem, size = 0x8000, scoped, tag = 'input window, operand 6, single buffered']
    #allocation13 [shape = 's32[1]{0}', space=sflag, size = 0x4, scoped, tag = 'scoped memory for tpu_custom_call.1']
    #allocation14 [shape = 'u8[16384]{0}', space=vmem, size = 0x4000, scoped, tag = 'input window, operand 8, single buffered']
    #allocation15 [shape = 'u8[16384]{0}', space=vmem, size = 0x4000, scoped, tag = 'input window, operand 10, single buffered']
    #allocation16 [shape = 's32[1]{0}', space=sflag, size = 0x4, scoped, tag = 'scoped memory for tpu_custom_call.1']
    #allocation17 [shape = 'u8[16384]{0}', space=vmem, size = 0x4000, scoped, tag = 'input window, operand 12, single buffered']
    #allocation18 [shape = 'u8[16384]{0}', space=vmem, size = 0x4000, scoped, tag = 'input window, operand 13, single buffered']
    #allocation19 [shape = 's32[1]{0}', space=sflag, size = 0x4, scoped, tag = 'scoped memory for tpu_custom_call.1']
    #allocation20 [shape = 'u8[8192]{0}', space=vmem, size = 0x2000, scoped, tag = 'output window, operand 0']
    %20 = vsyncpa [#allocation4], 0
    %s21 = scalar_lea.sflag [#allocation4], 1
    %22 = vsyncpa %s21, 0
    %23 = vsyncpa [#allocation7], 0
    %s24 = scalar_lea.sflag [#allocation7], 1
    %25 = vsyncpa %s24, 0
    %26 = vsyncpa [#allocation10], 0
    %27 = vsyncpa [#allocation13], 0
    %28 = vsyncpa [#allocation16], 0
    %29 = vsyncpa [#allocation19], 0
    %30 = vsyncpa [#allocation5], 0
    %s31 = scalar_lea.sflag [#allocation5], 1
    %32 = vsyncpa %s31, 0
    loop: start=0, step=1, limit=4
    $region2: #{tpu_custom_call.1} parent=1 // loop_pre_header
      _
    $region3: #{tpu_custom_call.1} parent=1 // loop_header
      %s34 = sphi 0, %s38
      %p35 = scmp.ge.s32.totalorder %s34, 4
      %s44 = sphi 0, %s46
      %s47 = sphi 0, %s44
      %s48 = sphi 0, %s47
      %s64 = sphi 0, %s48
      %s70 = sphi 0, %s72
      %s73 = sphi 0, %s70
      %s74 = sphi 0, %s73
      %s90 = sphi 0, %s74
      %s94 = sphi 0, %s94
      %s96 = sphi 0, %s94
      %s97 = sphi 0, %s96
      %s111 = sphi 0, %s97
      %s115 = sphi 0, %s115
      %s117 = sphi 0, %s115
      %s118 = sphi 0, %s117
      %s132 = sphi 0, %s118
      %s136 = sphi 0, %s136
      %s138 = sphi 0, %s136
      %s139 = sphi 0, %s138
      %s153 = sphi 0, %s139
      %s157 = sphi 0, %s157
      %s159 = sphi 0, %s157
      %s160 = sphi 0, %s159
      %s174 = sphi 0, %s160
      %s178 = sphi 0, %s178
      %s180 = sphi 0, %s178
      %s181 = sphi 0, %s180
      %s195 = sphi 0, %s181
      %s199 = sphi 0, %s199
      %s201 = sphi 0, %s199
      %s202 = sphi 0, %s201
      %s216 = sphi 0, %s202
      %s220 = sphi 0, %s220
      %s222 = sphi 0, %s220
      %s223 = sphi 0, %s222
      %s237 = sphi 0, %s223
      %s241 = sphi 0, %s241
      %s243 = sphi 0, %s241
      %s244 = sphi 0, %s243
      %s258 = sphi 0, %s244
      %s262 = sphi 0, %s262
      %s264 = sphi 0, %s262
      %s265 = sphi 0, %s264
      %s279 = sphi 0, %s265
      %s283 = sphi 0, %s283
      %s285 = sphi 0, %s283
      %s286 = sphi 0, %s285
      %s300 = sphi 0, %s286
      %s304 = sphi 0, %s304
      %s306 = sphi 0, %s304
      %s307 = sphi 0, %s306
      %s321 = sphi 0, %s307
      %s325 = sphi 0, %s325
      %s327 = sphi 0, %s325
      %s328 = sphi 0, %s327
      %s342 = sphi 0, %s328
      %s346 = sphi 0, %s346
      %s348 = sphi 0, %s346
      %s349 = sphi 0, %s348
      %s363 = sphi 0, %s349
      %s369 = sphi 0, %s371
      %s372 = sphi 0, %s369
      %s373 = sphi 0, %s372
      %s389 = sphi 0, %s373
    $region4: #{tpu_custom_call.1} parent=1 // loop_header_branch
      %37 = sbr.rel (%p35) target = $region8
    $region5: #{tpu_custom_call.1} parent=1 // loop_body
      %s39 = ssub.s32 %s34, 1
      %s40 = ssub.s32 %s34, 2
      %s41 = sadd.s32 %s34, 1
      %s42 = ssub.s32 %s34, %s41
      %p43 = scmp.eq.s32.totalorder %s42, 0
      %s45 = sadd.s32 %s44, 1
      %s46 = scalar_select %p43, %s44, %s45
      %p49 = pneg %p43
      %p50 = scmp.eq.s32.totalorder %s34, 1
      %p51 = por %p49, %p50
      %p52 = scmp.ne.s32.totalorder %s44, %s47
      %p53 = scmp.eq.s32.totalorder %s34, 0
      %p54 = por %p52, %p53
      %p55 = scmp.ne.s32.totalorder %s44, %s47
      %p56 = scmp.eq.s32.totalorder %s39, 1
      %p57 = por %p55, %p56
      %p58 = scmp.ne.s32.totalorder %s47, %s48
      %p59 = scmp.eq.s32.totalorder %s39, 0
      %p60 = por %p58, %p59
      %p61 = scmp.ne.s32.totalorder %s47, %s48
      %p62 = scmp.eq.s32.totalorder %s40, 1
      %p63 = por %p61, %p62
      %p65 = scmp.ne.s32.totalorder %s48, %s64
      %p66 = scmp.eq.s32.totalorder %s40, 0
      %p67 = por %p65, %p66
      %s68 = ssub.s32 %s34, %s41
      %p69 = scmp.eq.s32.totalorder %s68, 0
      %s71 = sadd.s32 %s70, 1
      %s72 = scalar_select %p69, %s70, %s71
      %p75 = pneg %p69
      %p76 = scmp.eq.s32.totalorder %s34, 1
      %p77 = por %p75, %p76
      %p78 = scmp.ne.s32.totalorder %s70, %s73
      %p79 = scmp.eq.s32.totalorder %s34, 0
      %p80 = por %p78, %p79
      %p81 = scmp.ne.s32.totalorder %s70, %s73
      %p82 = scmp.eq.s32.totalorder %s39, 1
      %p83 = por %p81, %p82
      %p84 = scmp.ne.s32.totalorder %s73, %s74
      %p85 = scmp.eq.s32.totalorder %s39, 0
      %p86 = por %p84, %p85
      %p87 = scmp.ne.s32.totalorder %s73, %s74
      %p88 = scmp.eq.s32.totalorder %s40, 1
      %p89 = por %p87, %p88
      %p91 = scmp.ne.s32.totalorder %s74, %s90
      %p92 = scmp.eq.s32.totalorder %s40, 0
      %p93 = por %p91, %p92
      %s95 = sadd.s32 %s94, 1
      %p98 = scmp.eq.s32.totalorder %s34, 1
      %p99 = scmp.ne.s32.totalorder %s94, %s96
      %p100 = scmp.eq.s32.totalorder %s34, 0
      %p101 = por %p99, %p100
      %p102 = scmp.ne.s32.totalorder %s94, %s96
      %p103 = scmp.eq.s32.totalorder %s39, 1
      %p104 = por %p102, %p103
      %p105 = scmp.ne.s32.totalorder %s96, %s97
      %p106 = scmp.eq.s32.totalorder %s39, 0
      %p107 = por %p105, %p106
      %p108 = scmp.ne.s32.totalorder %s96, %s97
      %p109 = scmp.eq.s32.totalorder %s40, 1
      %p110 = por %p108, %p109
      %p112 = scmp.ne.s32.totalorder %s97, %s111
      %p113 = scmp.eq.s32.totalorder %s40, 0
      %p114 = por %p112, %p113
      %s116 = sadd.s32 %s115, 1
      %p119 = scmp.eq.s32.totalorder %s34, 1
      %p120 = scmp.ne.s32.totalorder %s115, %s117
      %p121 = scmp.eq.s32.totalorder %s34, 0
      %p122 = por %p120, %p121
      %p123 = scmp.ne.s32.totalorder %s115, %s117
      %p124 = scmp.eq.s32.totalorder %s39, 1
      %p125 = por %p123, %p124
      %p126 = scmp.ne.s32.totalorder %s117, %s118
      %p127 = scmp.eq.s32.totalorder %s39, 0
      %p128 = por %p126, %p127
      %p129 = scmp.ne.s32.totalorder %s117, %s118
      %p130 = scmp.eq.s32.totalorder %s40, 1
      %p131 = por %p129, %p130
      %p133 = scmp.ne.s32.totalorder %s118, %s132
      %p134 = scmp.eq.s32.totalorder %s40, 0
      %p135 = por %p133, %p134
      %s137 = sadd.s32 %s136, 1
      %p140 = scmp.eq.s32.totalorder %s34, 1
      %p141 = scmp.ne.s32.totalorder %s136, %s138
      %p142 = scmp.eq.s32.totalorder %s34, 0
      %p143 = por %p141, %p142
      %p144 = scmp.ne.s32.totalorder %s136, %s138
      %p145 = scmp.eq.s32.totalorder %s39, 1
      %p146 = por %p144, %p145
      %p147 = scmp.ne.s32.totalorder %s138, %s139
      %p148 = scmp.eq.s32.totalorder %s39, 0
      %p149 = por %p147, %p148
      %p150 = scmp.ne.s32.totalorder %s138, %s139
      %p151 = scmp.eq.s32.totalorder %s40, 1
      %p152 = por %p150, %p151
      %p154 = scmp.ne.s32.totalorder %s139, %s153
      %p155 = scmp.eq.s32.totalorder %s40, 0
      %p156 = por %p154, %p155
      %s158 = sadd.s32 %s157, 1
      %p161 = scmp.eq.s32.totalorder %s34, 1
      %p162 = scmp.ne.s32.totalorder %s157, %s159
      %p163 = scmp.eq.s32.totalorder %s34, 0
      %p164 = por %p162, %p163
      %p165 = scmp.ne.s32.totalorder %s157, %s159
      %p166 = scmp.eq.s32.totalorder %s39, 1
      %p167 = por %p165, %p166
      %p168 = scmp.ne.s32.totalorder %s159, %s160
      %p169 = scmp.eq.s32.totalorder %s39, 0
      %p170 = por %p168, %p169
      %p171 = scmp.ne.s32.totalorder %s159, %s160
      %p172 = scmp.eq.s32.totalorder %s40, 1
      %p173 = por %p171, %p172
      %p175 = scmp.ne.s32.totalorder %s160, %s174
      %p176 = scmp.eq.s32.totalorder %s40, 0
      %p177 = por %p175, %p176
      %s179 = sadd.s32 %s178, 1
      %p182 = scmp.eq.s32.totalorder %s34, 1
      %p183 = scmp.ne.s32.totalorder %s178, %s180
      %p184 = scmp.eq.s32.totalorder %s34, 0
      %p185 = por %p183, %p184
      %p186 = scmp.ne.s32.totalorder %s178, %s180
      %p187 = scmp.eq.s32.totalorder %s39, 1
      %p188 = por %p186, %p187
      %p189 = scmp.ne.s32.totalorder %s180, %s181
      %p190 = scmp.eq.s32.totalorder %s39, 0
      %p191 = por %p189, %p190
      %p192 = scmp.ne.s32.totalorder %s180, %s181
      %p193 = scmp.eq.s32.totalorder %s40, 1
      %p194 = por %p192, %p193
      %p196 = scmp.ne.s32.totalorder %s181, %s195
      %p197 = scmp.eq.s32.totalorder %s40, 0
      %p198 = por %p196, %p197
      %s200 = sadd.s32 %s199, 1
      %p203 = scmp.eq.s32.totalorder %s34, 1
      %p204 = scmp.ne.s32.totalorder %s199, %s201
      %p205 = scmp.eq.s32.totalorder %s34, 0
      %p206 = por %p204, %p205
      %p207 = scmp.ne.s32.totalorder %s199, %s201
      %p208 = scmp.eq.s32.totalorder %s39, 1
      %p209 = por %p207, %p208
      %p210 = scmp.ne.s32.totalorder %s201, %s202
      %p211 = scmp.eq.s32.totalorder %s39, 0
      %p212 = por %p210, %p211
      %p213 = scmp.ne.s32.totalorder %s201, %s202
      %p214 = scmp.eq.s32.totalorder %s40, 1
      %p215 = por %p213, %p214
      %p217 = scmp.ne.s32.totalorder %s202, %s216
      %p218 = scmp.eq.s32.totalorder %s40, 0
      %p219 = por %p217, %p218
      %s221 = sadd.s32 %s220, 1
      %p224 = scmp.eq.s32.totalorder %s34, 1
      %p225 = scmp.ne.s32.totalorder %s220, %s222
      %p226 = scmp.eq.s32.totalorder %s34, 0
      %p227 = por %p225, %p226
      %p228 = scmp.ne.s32.totalorder %s220, %s222
      %p229 = scmp.eq.s32.totalorder %s39, 1
      %p230 = por %p228, %p229
      %p231 = scmp.ne.s32.totalorder %s222, %s223
      %p232 = scmp.eq.s32.totalorder %s39, 0
      %p233 = por %p231, %p232
      %p234 = scmp.ne.s32.totalorder %s222, %s223
      %p235 = scmp.eq.s32.totalorder %s40, 1
      %p236 = por %p234, %p235
      %p238 = scmp.ne.s32.totalorder %s223, %s237
      %p239 = scmp.eq.s32.totalorder %s40, 0
      %p240 = por %p238, %p239
      %s242 = sadd.s32 %s241, 1
      %p245 = scmp.eq.s32.totalorder %s34, 1
      %p246 = scmp.ne.s32.totalorder %s241, %s243
      %p247 = scmp.eq.s32.totalorder %s34, 0
      %p248 = por %p246, %p247
      %p249 = scmp.ne.s32.totalorder %s241, %s243
      %p250 = scmp.eq.s32.totalorder %s39, 1
      %p251 = por %p249, %p250
      %p252 = scmp.ne.s32.totalorder %s243, %s244
      %p253 = scmp.eq.s32.totalorder %s39, 0
      %p254 = por %p252, %p253
      %p255 = scmp.ne.s32.totalorder %s243, %s244
      %p256 = scmp.eq.s32.totalorder %s40, 1
      %p257 = por %p255, %p256
      %p259 = scmp.ne.s32.totalorder %s244, %s258
      %p260 = scmp.eq.s32.totalorder %s40, 0
      %p261 = por %p259, %p260
      %s263 = sadd.s32 %s262, 1
      %p266 = scmp.eq.s32.totalorder %s34, 1
      %p267 = scmp.ne.s32.totalorder %s262, %s264
      %p268 = scmp.eq.s32.totalorder %s34, 0
      %p269 = por %p267, %p268
      %p270 = scmp.ne.s32.totalorder %s262, %s264
      %p271 = scmp.eq.s32.totalorder %s39, 1
      %p272 = por %p270, %p271
      %p273 = scmp.ne.s32.totalorder %s264, %s265
      %p274 = scmp.eq.s32.totalorder %s39, 0
      %p275 = por %p273, %p274
      %p276 = scmp.ne.s32.totalorder %s264, %s265
      %p277 = scmp.eq.s32.totalorder %s40, 1
      %p278 = por %p276, %p277
      %p280 = scmp.ne.s32.totalorder %s265, %s279
      %p281 = scmp.eq.s32.totalorder %s40, 0
      %p282 = por %p280, %p281
      %s284 = sadd.s32 %s283, 1
      %p287 = scmp.eq.s32.totalorder %s34, 1
      %p288 = scmp.ne.s32.totalorder %s283, %s285
      %p289 = scmp.eq.s32.totalorder %s34, 0
      %p290 = por %p288, %p289
      %p291 = scmp.ne.s32.totalorder %s283, %s285
      %p292 = scmp.eq.s32.totalorder %s39, 1
      %p293 = por %p291, %p292
      %p294 = scmp.ne.s32.totalorder %s285, %s286
      %p295 = scmp.eq.s32.totalorder %s39, 0
      %p296 = por %p294, %p295
      %p297 = scmp.ne.s32.totalorder %s285, %s286
      %p298 = scmp.eq.s32.totalorder %s40, 1
      %p299 = por %p297, %p298
      %p301 = scmp.ne.s32.totalorder %s286, %s300
      %p302 = scmp.eq.s32.totalorder %s40, 0
      %p303 = por %p301, %p302
      %s305 = sadd.s32 %s304, 1
      %p308 = scmp.eq.s32.totalorder %s34, 1
      %p309 = scmp.ne.s32.totalorder %s304, %s306
      %p310 = scmp.eq.s32.totalorder %s34, 0
      %p311 = por %p309, %p310
      %p312 = scmp.ne.s32.totalorder %s304, %s306
      %p313 = scmp.eq.s32.totalorder %s39, 1
      %p314 = por %p312, %p313
      %p315 = scmp.ne.s32.totalorder %s306, %s307
      %p316 = scmp.eq.s32.totalorder %s39, 0
      %p317 = por %p315, %p316
      %p318 = scmp.ne.s32.totalorder %s306, %s307
      %p319 = scmp.eq.s32.totalorder %s40, 1
      %p320 = por %p318, %p319
      %p322 = scmp.ne.s32.totalorder %s307, %s321
      %p323 = scmp.eq.s32.totalorder %s40, 0
      %p324 = por %p322, %p323
      %s326 = sadd.s32 %s325, 1
      %p329 = scmp.eq.s32.totalorder %s34, 1
      %p330 = scmp.ne.s32.totalorder %s325, %s327
      %p331 = scmp.eq.s32.totalorder %s34, 0
      %p332 = por %p330, %p331
      %p333 = scmp.ne.s32.totalorder %s325, %s327
      %p334 = scmp.eq.s32.totalorder %s39, 1
      %p335 = por %p333, %p334
      %p336 = scmp.ne.s32.totalorder %s327, %s328
      %p337 = scmp.eq.s32.totalorder %s39, 0
      %p338 = por %p336, %p337
      %p339 = scmp.ne.s32.totalorder %s327, %s328
      %p340 = scmp.eq.s32.totalorder %s40, 1
      %p341 = por %p339, %p340
      %p343 = scmp.ne.s32.totalorder %s328, %s342
      %p344 = scmp.eq.s32.totalorder %s40, 0
      %p345 = por %p343, %p344
      %s347 = sadd.s32 %s346, 1
      %p350 = scmp.eq.s32.totalorder %s34, 1
      %p351 = scmp.ne.s32.totalorder %s346, %s348
      %p352 = scmp.eq.s32.totalorder %s34, 0
      %p353 = por %p351, %p352
      %p354 = scmp.ne.s32.totalorder %s346, %s348
      %p355 = scmp.eq.s32.totalorder %s39, 1
      %p356 = por %p354, %p355
      %p357 = scmp.ne.s32.totalorder %s348, %s349
      %p358 = scmp.eq.s32.totalorder %s39, 0
      %p359 = por %p357, %p358
      %p360 = scmp.ne.s32.totalorder %s348, %s349
      %p361 = scmp.eq.s32.totalorder %s40, 1
      %p362 = por %p360, %p361
      %p364 = scmp.ne.s32.totalorder %s349, %s363
      %p365 = scmp.eq.s32.totalorder %s40, 0
      %p366 = por %p364, %p365
      %s367 = ssub.s32 %s34, %s41
      %p368 = scmp.eq.s32.totalorder %s367, 0
      %s370 = sadd.s32 %s369, 1
      %s371 = scalar_select %p368, %s369, %s370
      %p374 = pneg %p368
      %p375 = scmp.eq.s32.totalorder %s34, 1
      %p376 = por %p374, %p375
      %p377 = scmp.ne.s32.totalorder %s369, %s372
      %p378 = scmp.eq.s32.totalorder %s34, 0
      %p379 = por %p377, %p378
      %p380 = scmp.ne.s32.totalorder %s369, %s372
      %p381 = scmp.eq.s32.totalorder %s39, 1
      %p382 = por %p380, %p381
      %p383 = scmp.ne.s32.totalorder %s372, %s373
      %p384 = scmp.eq.s32.totalorder %s39, 0
      %p385 = por %p383, %p384
      %p386 = scmp.ne.s32.totalorder %s372, %s373
      %p387 = scmp.eq.s32.totalorder %s40, 1
      %p388 = por %p386, %p387
      %p390 = scmp.ne.s32.totalorder %s373, %s389
      %p391 = scmp.eq.s32.totalorder %s40, 0
      %p392 = por %p390, %p391
      %p393 = scmp.le.s32.totalorder 1, %s34
      %p394 = scmp.lt.s32.totalorder %s34, 3
      %p395 = pnand %p393, %p394
      %p396 = pneg %p395
      // Predicated region
      $region9: #{tpu_custom_call.1} parent=5 // pred_check
        _
      $region10: #{tpu_custom_call.1} parent=5 // pred_check_branch
        %398 = sbr.rel (%p395) target = $region12
      $region11: #{tpu_custom_call.1} parent=5 // pred_region
        %s399 = ssub.s32 %s34, 1
        // Predicated region
        $region13: #{tpu_custom_call.1} parent=11 // pred_check
          %p400 = pneg %p107
        $region14: #{tpu_custom_call.1} parent=11 // pred_check_branch
          %402 = sbr.rel (%p400) target = $region16
        $region15: #{tpu_custom_call.1} parent=11 // pred_region
          %404 = vsyncadd [#allocation7], 0
          %s405 = sshll.u32 %s2, 4
          %s406 = int_to_ptr.hbm [resolvable:$true] %s405
          %s407 = sshll.u32 [#allocation8], 4
          %s408 = int_to_ptr.vmem [resolvable:$true] %s407
          %413 = dma.hbm_to_vmem [thread:$0]  %s406, 256, %s408, [#allocation7], 64, 64, 4
        $region16: #{tpu_custom_call.1} parent=11 // pred_fallthru
          _
        // Predicated region
        $region17: #{tpu_custom_call.1} parent=11 // pred_check
          %p414 = pneg %p128
        $region18: #{tpu_custom_call.1} parent=11 // pred_check_branch
          %416 = sbr.rel (%p414) target = $region20
        $region19: #{tpu_custom_call.1} parent=11 // pred_region
          %418 = vsyncadd [#allocation10], 0
          %s420 = sshll.u32 %s3, 4
          %s421 = int_to_ptr.hbm [resolvable:$true] %s420
          %s422 = sshll.u32 [#allocation9], 4
          %s423 = int_to_ptr.vmem [resolvable:$true] %s422
          %425 = dma.hbm_to_vmem [thread:$0]  %s421, 16, %s423, [#allocation10]
        $region20: #{tpu_custom_call.1} parent=11 // pred_fallthru
          _
        // Predicated region
        $region21: #{tpu_custom_call.1} parent=11 // pred_check
          %p426 = pneg %p149
        $region22: #{tpu_custom_call.1} parent=11 // pred_check_branch
          %428 = sbr.rel (%p426) target = $region24
        $region23: #{tpu_custom_call.1} parent=11 // pred_region
          %430 = vsyncadd [#allocation10], 0
          %s431 = sshll.u32 %s4, 4
          %s432 = int_to_ptr.hbm [resolvable:$true] %s431
          %s433 = sshll.u32 [#allocation11], 4
          %s434 = int_to_ptr.vmem [resolvable:$true] %s433
          %439 = dma.hbm_to_vmem [thread:$0]  %s432, 1024, %s434, [#allocation10], 128, 128, 8
        $region24: #{tpu_custom_call.1} parent=11 // pred_fallthru
          _
        // Predicated region
        $region25: #{tpu_custom_call.1} parent=11 // pred_check
          %p440 = pneg %p170
        $region26: #{tpu_custom_call.1} parent=11 // pred_check_branch
          %442 = sbr.rel (%p440) target = $region28
        $region27: #{tpu_custom_call.1} parent=11 // pred_region
          _
        $region28: #{tpu_custom_call.1} parent=11 // pred_fallthru
          _
        // Predicated region
        $region29: #{tpu_custom_call.1} parent=11 // pred_check
          %p443 = pneg %p191
        $region30: #{tpu_custom_call.1} parent=11 // pred_check_branch
          %445 = sbr.rel (%p443) target = $region32
        $region31: #{tpu_custom_call.1} parent=11 // pred_region
          %447 = vsyncadd [#allocation13], 0
          %s448 = sshll.u32 %s6, 4
          %s449 = int_to_ptr.hbm [resolvable:$true] %s448
          %s450 = sshll.u32 [#allocation12], 4
          %s451 = int_to_ptr.vmem [resolvable:$true] %s450
          %456 = dma.hbm_to_vmem [thread:$0]  %s449, 1024, %s451, [#allocation13], 128, 128, 8
        $region32: #{tpu_custom_call.1} parent=11 // pred_fallthru
          _
        // Predicated region
        $region33: #{tpu_custom_call.1} parent=11 // pred_check
          %p457 = pneg %p212
        $region34: #{tpu_custom_call.1} parent=11 // pred_check_branch
          %459 = sbr.rel (%p457) target = $region36
        $region35: #{tpu_custom_call.1} parent=11 // pred_region
          _
        $region36: #{tpu_custom_call.1} parent=11 // pred_fallthru
          _
        // Predicated region
        $region37: #{tpu_custom_call.1} parent=11 // pred_check
          %p460 = pneg %p233
        $region38: #{tpu_custom_call.1} parent=11 // pred_check_branch
          %462 = sbr.rel (%p460) target = $region40
        $region39: #{tpu_custom_call.1} parent=11 // pred_region
          %464 = vsyncadd [#allocation13], 0
          %s465 = sshll.u32 %s8, 4
          %s466 = int_to_ptr.hbm [resolvable:$true] %s465
          %s467 = sshll.u32 [#allocation14], 4
          %s468 = int_to_ptr.vmem [resolvable:$true] %s467
          %473 = dma.hbm_to_vmem [thread:$0]  %s466, 512, %s468, [#allocation13], 64, 64, 4
        $region40: #{tpu_custom_call.1} parent=11 // pred_fallthru
          _
        // Predicated region
        $region41: #{tpu_custom_call.1} parent=11 // pred_check
          %p474 = pneg %p254
        $region42: #{tpu_custom_call.1} parent=11 // pred_check_branch
          %476 = sbr.rel (%p474) target = $region44
        $region43: #{tpu_custom_call.1} parent=11 // pred_region
          _
        $region44: #{tpu_custom_call.1} parent=11 // pred_fallthru
          _
        // Predicated region
        $region45: #{tpu_custom_call.1} parent=11 // pred_check
          %p477 = pneg %p275
        $region46: #{tpu_custom_call.1} parent=11 // pred_check_branch
          %479 = sbr.rel (%p477) target = $region48
        $region47: #{tpu_custom_call.1} parent=11 // pred_region
          %481 = vsyncadd [#allocation16], 0
          %s482 = sshll.u32 %s10, 4
          %s483 = int_to_ptr.hbm [resolvable:$true] %s482
          %s484 = sshll.u32 [#allocation15], 4
          %s485 = int_to_ptr.vmem [resolvable:$true] %s484
          %490 = dma.hbm_to_vmem [thread:$0]  %s483, 512, %s485, [#allocation16], 64, 64, 4
        $region48: #{tpu_custom_call.1} parent=11 // pred_fallthru
          _
        // Predicated region
        $region49: #{tpu_custom_call.1} parent=11 // pred_check
          %p491 = pneg %p296
        $region50: #{tpu_custom_call.1} parent=11 // pred_check_branch
          %493 = sbr.rel (%p491) target = $region52
        $region51: #{tpu_custom_call.1} parent=11 // pred_region
          _
        $region52: #{tpu_custom_call.1} parent=11 // pred_fallthru
          _
        // Predicated region
        $region53: #{tpu_custom_call.1} parent=11 // pred_check
          %p494 = pneg %p317
        $region54: #{tpu_custom_call.1} parent=11 // pred_check_branch
          %496 = sbr.rel (%p494) target = $region56
        $region55: #{tpu_custom_call.1} parent=11 // pred_region
          %498 = vsyncadd [#allocation16], 0
          %s499 = sshll.u32 %s12, 4
          %s500 = int_to_ptr.hbm [resolvable:$true] %s499
          %s501 = sshll.u32 [#allocation17], 4
          %s502 = int_to_ptr.vmem [resolvable:$true] %s501
          %507 = dma.hbm_to_vmem [thread:$0]  %s500, 512, %s502, [#allocation16], 64, 64, 4
        $region56: #{tpu_custom_call.1} parent=11 // pred_fallthru
          _
        // Predicated region
        $region57: #{tpu_custom_call.1} parent=11 // pred_check
          %p508 = pneg %p338
        $region58: #{tpu_custom_call.1} parent=11 // pred_check_branch
          %510 = sbr.rel (%p508) target = $region60
        $region59: #{tpu_custom_call.1} parent=11 // pred_region
          %512 = vsyncadd [#allocation19], 0
          %s513 = sshll.u32 %s13, 4
          %s514 = int_to_ptr.hbm [resolvable:$true] %s513
          %s515 = sshll.u32 [#allocation18], 4
          %s516 = int_to_ptr.vmem [resolvable:$true] %s515
          %521 = dma.hbm_to_vmem [thread:$0]  %s514, 512, %s516, [#allocation19], 64, 64, 4
        $region60: #{tpu_custom_call.1} parent=11 // pred_fallthru
          _
        // Predicated region
        $region61: #{tpu_custom_call.1} parent=11 // pred_check
          %p522 = pneg %p359
        $region62: #{tpu_custom_call.1} parent=11 // pred_check_branch
          %524 = sbr.rel (%p522) target = $region64
        $region63: #{tpu_custom_call.1} parent=11 // pred_region
          _
        $region64: #{tpu_custom_call.1} parent=11 // pred_fallthru
          _
      $region12: #{tpu_custom_call.1} parent=5 // pred_fallthru
        _
      %p525 = scmp.lt.s32.totalorder %s34, 2
      // Predicated region
      $region65: #{tpu_custom_call.1} parent=5 // pred_check
        %p526 = pneg %p525
      $region66: #{tpu_custom_call.1} parent=5 // pred_check_branch
        %528 = sbr.rel (%p526) target = $region68
      $region67: #{tpu_custom_call.1} parent=5 // pred_region
        // Predicated region
        $region69: #{tpu_custom_call.1} parent=67 // pred_check
          %p529 = pneg %p54
        $region70: #{tpu_custom_call.1} parent=67 // pred_check_branch
          %531 = sbr.rel (%p529) target = $region72
        $region71: #{tpu_custom_call.1} parent=67 // pred_region
          %s532 = sand.u32 %s44, 1
          %s533 = scalar_lea.sflag [#allocation4], %s532
          %s534 = sand.u32 %s44, 1
          %s535 = smul.addr %s534, 8
          %s536 = scalar_lea.vmem [#allocation3], %s535
          %538 = vsyncadd %s533, 0
          %s539 = smul.addr %s34, 8
          %s540 = scalar_lea.hbm %s0, %s539
          %s542 = sshll.u32 %s540, 4
          %s543 = int_to_ptr.hbm [resolvable:$true] %s542
          %s544 = sshll.u32 %s536, 4
          %s545 = int_to_ptr.vmem [resolvable:$true] %s544
          %547 = dma.hbm_to_vmem [thread:$0]  %s543, 128, %s545, %s533
        $region72: #{tpu_custom_call.1} parent=67 // pred_fallthru
          _
        // Predicated region
        $region73: #{tpu_custom_call.1} parent=67 // pred_check
          %p548 = pneg %p80
        $region74: #{tpu_custom_call.1} parent=67 // pred_check_branch
          %550 = sbr.rel (%p548) target = $region76
        $region75: #{tpu_custom_call.1} parent=67 // pred_region
          %s551 = sand.u32 %s34, 1
          %s552 = scalar_lea.sflag [#allocation7], %s551
          %s553 = sand.u32 %s70, 1
          %s554 = scalar_lea.vmem [#allocation6], %s553
          %556 = vsyncadd %s552, 0
          %s557 = scalar_lea.hbm %s1, %s34
          %s559 = sshll.u32 %s557, 4
          %s560 = int_to_ptr.hbm [resolvable:$true] %s559
          %s561 = sshll.u32 %s554, 4
          %s562 = int_to_ptr.vmem [resolvable:$true] %s561
          %564 = dma.hbm_to_vmem [thread:$0]  %s560, 16, %s562, %s552
        $region76: #{tpu_custom_call.1} parent=67 // pred_fallthru
          _
      $region68: #{tpu_custom_call.1} parent=5 // pred_fallthru
        _
      %p565 = scmp.le.s32.totalorder 1, %s34
      %p566 = scmp.lt.s32.totalorder %s34, 3
      %p567 = pnand %p565, %p566
      %p568 = pneg %p567
      // Predicated region
      $region77: #{tpu_custom_call.1} parent=5 // pred_check
        _
      $region78: #{tpu_custom_call.1} parent=5 // pred_check_branch
        %570 = sbr.rel (%p567) target = $region80
      $region79: #{tpu_custom_call.1} parent=5 // pred_region
        %s571 = ssub.s32 %s34, 1
        %s572 = sand.u32 %s47, 1
        %s573 = scalar_lea.sflag [#allocation4], %s572
        %s574 = sand.u32 %s47, 1
        %s575 = smul.addr %s574, 8
        %s576 = scalar_lea.vmem [#allocation3], %s575
        // Predicated region
        $region81: #{tpu_custom_call.1} parent=79 // pred_check
          %p577 = pneg %p60
        $region82: #{tpu_custom_call.1} parent=79 // pred_check_branch
          %579 = sbr.rel (%p577) target = $region84
        $region83: #{tpu_custom_call.1} parent=79 // pred_region
          %581 = dma.done %s573, 128
        $region84: #{tpu_custom_call.1} parent=79 // pred_fallthru
          _
        %s582 = sand.u32 %s39, 1
        %s583 = scalar_lea.sflag [#allocation7], %s582
        %s584 = sand.u32 %s73, 1
        %s585 = scalar_lea.vmem [#allocation6], %s584
        // Predicated region
        $region85: #{tpu_custom_call.1} parent=79 // pred_check
          %p586 = pneg %p86
        $region86: #{tpu_custom_call.1} parent=79 // pred_check_branch
          %588 = sbr.rel (%p586) target = $region88
        $region87: #{tpu_custom_call.1} parent=79 // pred_region
          %590 = dma.done %s583, 16
        $region88: #{tpu_custom_call.1} parent=79 // pred_fallthru
          _
        // Predicated region
        $region89: #{tpu_custom_call.1} parent=79 // pred_check
          %p591 = pneg %p107
        $region90: #{tpu_custom_call.1} parent=79 // pred_check_branch
          %593 = sbr.rel (%p591) target = $region92
        $region91: #{tpu_custom_call.1} parent=79 // pred_region
          %595 = dma.done [#allocation7], 256
        $region92: #{tpu_custom_call.1} parent=79 // pred_fallthru
          _
        // Predicated region
        $region93: #{tpu_custom_call.1} parent=79 // pred_check
          %p596 = pneg %p128
        $region94: #{tpu_custom_call.1} parent=79 // pred_check_branch
          %598 = sbr.rel (%p596) target = $region96
        $region95: #{tpu_custom_call.1} parent=79 // pred_region
          %600 = dma.done [#allocation10], 16
        $region96: #{tpu_custom_call.1} parent=79 // pred_fallthru
          _
        // Predicated region
        $region97: #{tpu_custom_call.1} parent=79 // pred_check
          %p601 = pneg %p149
        $region98: #{tpu_custom_call.1} parent=79 // pred_check_branch
          %603 = sbr.rel (%p601) target = $region100
        $region99: #{tpu_custom_call.1} parent=79 // pred_region
          %605 = dma.done [#allocation10], 1024
        $region100: #{tpu_custom_call.1} parent=79 // pred_fallthru
          _
        // Predicated region
        $region101: #{tpu_custom_call.1} parent=79 // pred_check
          %p606 = pneg %p191
        $region102: #{tpu_custom_call.1} parent=79 // pred_check_branch
          %608 = sbr.rel (%p606) target = $region104
        $region103: #{tpu_custom_call.1} parent=79 // pred_region
          %610 = dma.done [#allocation13], 1024
        $region104: #{tpu_custom_call.1} parent=79 // pred_fallthru
          _
        // Predicated region
        $region105: #{tpu_custom_call.1} parent=79 // pred_check
          %p611 = pneg %p233
        $region106: #{tpu_custom_call.1} parent=79 // pred_check_branch
          %613 = sbr.rel (%p611) target = $region108
        $region107: #{tpu_custom_call.1} parent=79 // pred_region
          %615 = dma.done [#allocation13], 512
        $region108: #{tpu_custom_call.1} parent=79 // pred_fallthru
          _
        // Predicated region
        $region109: #{tpu_custom_call.1} parent=79 // pred_check
          %p616 = pneg %p275
        $region110: #{tpu_custom_call.1} parent=79 // pred_check_branch
          %618 = sbr.rel (%p616) target = $region112
        $region111: #{tpu_custom_call.1} parent=79 // pred_region
          %620 = dma.done [#allocation16], 512
        $region112: #{tpu_custom_call.1} parent=79 // pred_fallthru
          _
        // Predicated region
        $region113: #{tpu_custom_call.1} parent=79 // pred_check
          %p621 = pneg %p317
        $region114: #{tpu_custom_call.1} parent=79 // pred_check_branch
          %623 = sbr.rel (%p621) target = $region116
        $region115: #{tpu_custom_call.1} parent=79 // pred_region
          %625 = dma.done [#allocation16], 512
        $region116: #{tpu_custom_call.1} parent=79 // pred_fallthru
          _
        // Predicated region
        $region117: #{tpu_custom_call.1} parent=79 // pred_check
          %p626 = pneg %p338
        $region118: #{tpu_custom_call.1} parent=79 // pred_check_branch
          %628 = sbr.rel (%p626) target = $region120
        $region119: #{tpu_custom_call.1} parent=79 // pred_region
          %630 = dma.done [#allocation19], 512
        $region120: #{tpu_custom_call.1} parent=79 // pred_fallthru
          _
        %s631 = sand.u32 %s47, 1
        %s632 = scalar_lea.sflag [#allocation4], %s631
        %s633 = sand.u32 %s47, 1
        %s634 = smul.addr %s633, 8
        %s635 = scalar_lea.vmem [#allocation3], %s634
        %p636 = pneg %p60
        %p637 = pneg %p57
        %s638 = sand.u32 %s39, 1
        %s639 = scalar_lea.sflag [#allocation7], %s638
        %s640 = sand.u32 %s73, 1
        %s641 = scalar_lea.vmem [#allocation6], %s640
        %p642 = pneg %p86
        %p643 = pneg %p83
        %p644 = pneg %p107
        %p645 = pneg %p104
        %p646 = pneg %p128
        %p647 = pneg %p125
        %p648 = pneg %p149
        %p649 = pneg %p146
        %p650 = pneg %p170
        %p651 = pneg %p167
        %p652 = pneg %p191
        %p653 = pneg %p188
        %p654 = pneg %p212
        %p655 = pneg %p209
        %p656 = pneg %p233
        %p657 = pneg %p230
        %p658 = pneg %p254
        %p659 = pneg %p251
        %p660 = pneg %p275
        %p661 = pneg %p272
        %p662 = pneg %p296
        %p663 = pneg %p293
        %p664 = pneg %p317
        %p665 = pneg %p314
        %p666 = pneg %p338
        %p667 = pneg %p335
        %p668 = pneg %p359
        %p669 = pneg %p356
        %p670 = pneg %p385
        %p671 = pneg %p382
        %s672 = sand.u32 %s372, 1
        %s673 = scalar_lea.sflag [#allocation5], %s672
        %s674 = sand.u32 %s372, 1
        %s675 = smul.addr %s674, 8
        %s676 = scalar_lea.vmem [#allocation20], %s675
        %v678 = vld [vmem:[%s585] sm:$0x1]
        %vm679 = vcmp.gt.f32.partialorder %v678, 0.5
        %v680 = vsel %vm679, 0.0, -1e+09
        %v681 = vld [vmem:[%s576] sm:$0xff]
        %v682 = vpack.c.bf16 %v681, %v681
        %v683 = vld [vmem:[#allocation8] sm:$0xf]
        %v684 = vld [vmem:[#allocation8 + $0x4] sm:$0xf]
        %v685 = vld [vmem:[#allocation8 + $0x8] sm:$0xf]
        %v686 = vld [vmem:[#allocation8 + $0xc] sm:$0xf]
        %v687 = vld [vmem:[#allocation9] sm:$0x1]
        %v689 = vperm.slane %v687, 0
        %v695 = vunpack.c.l.b16 %v683
        %v696 = vunpack.c.l.b16 %v684
        %v697 = vunpack.c.l.b16 %v685
        %v698 = vunpack.c.l.b16 %v686
        %v699 = vpack.c.b16 %v696, %v695
        %v700 = vpack.c.b16 %v698, %v697
        %vm703 = vcmask 261120
        %v705 = vsel %vm703, %v682, 0
        %707 = vmatpush.bf16.msra.mxu0 0
        %708 = vmatpush.bf16.msra.mxu0 0
        %709 = vmatpush.bf16.msra.mxu0 0
        %710 = vmatpush.bf16.msra.mxu0 0
        %711 = vmatpush.bf16.msra.mxu0 0
        %712 = vmatpush.bf16.msra.mxu0 0
        %713 = vmatpush.bf16.msra.mxu0 %v700
        %714 = vmatpush.bf16.msra.mxu0 %v699
        %715 = vmatmul.bf16.gmra.mxu0 %v705
        %v716 = vpop.f32.mrf.mxu0
        %v717 = vadd.f32 %v689, %v716
        %v718 = vpop.f32.mrf.mxu0
        %719 = vdwg.mxu0
        %v720 = vpack.c.bf16 %v717, %v717
        %v721 = vld [vmem:[#allocation11] sm:$0xff]
        %v722 = vld [vmem:[#allocation11 + $0x8] sm:$0xff]
        %v723 = vld [vmem:[#allocation11 + $0x10] sm:$0xff]
        %v724 = vld [vmem:[#allocation11 + $0x18] sm:$0xff]
        %v725 = vld [vmem:[#allocation11 + $0x20] sm:$0xff]
        %v726 = vld [vmem:[#allocation11 + $0x28] sm:$0xff]
        %v727 = vld [vmem:[#allocation11 + $0x30] sm:$0xff]
        %v728 = vld [vmem:[#allocation11 + $0x38] sm:$0xff]
        %v729 = vld [vmem:[%s5] sm:$0x3]
        %v731 = vperm.slane %v729, 0
        %v732 = vperm.slane %v729, 1
        %v743 = vunpack.c.l.b16 %v721
        %v744 = vunpack.c.h.b16 %v721
        %v745 = vunpack.c.l.b16 %v722
        %v746 = vunpack.c.h.b16 %v722
        %v747 = vunpack.c.l.b16 %v723
        %v748 = vunpack.c.h.b16 %v723
        %v749 = vunpack.c.l.b16 %v724
        %v750 = vunpack.c.h.b16 %v724
        %v751 = vunpack.c.l.b16 %v725
        %v752 = vunpack.c.h.b16 %v725
        %v753 = vunpack.c.l.b16 %v726
        %v754 = vunpack.c.h.b16 %v726
        %v755 = vunpack.c.l.b16 %v727
        %v756 = vunpack.c.h.b16 %v727
        %v757 = vunpack.c.l.b16 %v728
        %v758 = vunpack.c.h.b16 %v728
        %v759 = vpack.c.b16 %v745, %v743
        %v760 = vpack.c.b16 %v746, %v744
        %v761 = vpack.c.b16 %v749, %v747
        %v762 = vpack.c.b16 %v750, %v748
        %v763 = vpack.c.b16 %v753, %v751
        %v764 = vpack.c.b16 %v754, %v752
        %v765 = vpack.c.b16 %v757, %v755
        %v766 = vpack.c.b16 %v758, %v756
        %vm775 = vcmask 523264
        %v777 = vsel %vm775, %v720, 0
        %779 = vmatpush.bf16.msra.mxu0 0
        %780 = vmatpush.bf16.msra.mxu0 0
        %781 = vmatpush.bf16.msra.mxu0 0
        %782 = vmatpush.bf16.msra.mxu0 0
        %783 = vmatpush.bf16.msra.mxu0 %v765
        %784 = vmatpush.bf16.msra.mxu0 %v763
        %785 = vmatpush.bf16.msra.mxu0 %v761
        %786 = vmatpush.bf16.msra.mxu0 %v759
        %787 = vmatmul.bf16.gmra.mxu0 %v777
        %v788 = vpop.f32.mrf.mxu0
        %v789 = vadd.f32 %v731, %v788
        %v790 = vpop.f32.mrf.mxu0
        %791 = vdwg.mxu0
        %792 = vmatpush.bf16.msra.mxu0 0
        %793 = vmatpush.bf16.msra.mxu0 0
        %794 = vmatpush.bf16.msra.mxu0 0
        %795 = vmatpush.bf16.msra.mxu0 0
        %796 = vmatpush.bf16.msra.mxu0 %v766
        %797 = vmatpush.bf16.msra.mxu0 %v764
        %798 = vmatpush.bf16.msra.mxu0 %v762
        %799 = vmatpush.bf16.msra.mxu0 %v760
        %800 = vmatmul.bf16.gmra.mxu0 %v777
        %v801 = vpop.f32.mrf.mxu0
        %v802 = vadd.f32 %v732, %v801
        %v803 = vpop.f32.mrf.mxu0
        %804 = vdwg.mxu0
        %v805 = vld [vmem:[#allocation12] sm:$0xff]
        %v806 = vld [vmem:[#allocation12 + $0x8] sm:$0xff]
        %v807 = vld [vmem:[#allocation12 + $0x10] sm:$0xff]
        %v808 = vld [vmem:[#allocation12 + $0x18] sm:$0xff]
        %v809 = vld [vmem:[#allocation12 + $0x20] sm:$0xff]
        %v810 = vld [vmem:[#allocation12 + $0x28] sm:$0xff]
        %v811 = vld [vmem:[#allocation12 + $0x30] sm:$0xff]
        %v812 = vld [vmem:[#allocation12 + $0x38] sm:$0xff]
        %v813 = vld [vmem:[%s7] sm:$0x3]
        %v815 = vperm.slane %v813, 0
        %v816 = vperm.slane %v813, 1
        %820 = vrot.lane.b32.xlu0 %v720, 64
        %v821 = vpop.permute.xlu0 %820
        %v830 = vunpack.c.l.b16 %v805
        %v831 = vunpack.c.h.b16 %v805
        %v832 = vunpack.c.l.b16 %v806
        %v833 = vunpack.c.h.b16 %v806
        %v834 = vunpack.c.l.b16 %v807
        %v835 = vunpack.c.h.b16 %v807
        %v836 = vunpack.c.l.b16 %v808
        %v837 = vunpack.c.h.b16 %v808
        %v838 = vunpack.c.l.b16 %v809
        %v839 = vunpack.c.h.b16 %v809
        %v840 = vunpack.c.l.b16 %v810
        %v841 = vunpack.c.h.b16 %v810
        %v842 = vunpack.c.l.b16 %v811
        %v843 = vunpack.c.h.b16 %v811
        %v844 = vunpack.c.l.b16 %v812
        %v845 = vunpack.c.h.b16 %v812
        %v846 = vpack.c.b16 %v832, %v830
        %v847 = vpack.c.b16 %v833, %v831
        %v848 = vpack.c.b16 %v836, %v834
        %v849 = vpack.c.b16 %v837, %v835
        %v850 = vpack.c.b16 %v840, %v838
        %v851 = vpack.c.b16 %v841, %v839
        %v852 = vpack.c.b16 %v844, %v842
        %v853 = vpack.c.b16 %v845, %v843
        %v863 = vsel %vm775, %v821, 0
        %865 = vmatpush.bf16.msra.mxu0 0
        %866 = vmatpush.bf16.msra.mxu0 0
        %867 = vmatpush.bf16.msra.mxu0 0
        %868 = vmatpush.bf16.msra.mxu0 0
        %869 = vmatpush.bf16.msra.mxu0 %v852
        %870 = vmatpush.bf16.msra.mxu0 %v850
        %871 = vmatpush.bf16.msra.mxu0 %v848
        %872 = vmatpush.bf16.msra.mxu0 %v846
        %873 = vmatmul.bf16.gmra.mxu0 %v863
        %v874 = vpop.f32.mrf.mxu0
        %v875 = vadd.f32 %v815, %v874
        %v876 = vpop.f32.mrf.mxu0
        %877 = vdwg.mxu0
        %878 = vmatpush.bf16.msra.mxu0 0
        %879 = vmatpush.bf16.msra.mxu0 0
        %880 = vmatpush.bf16.msra.mxu0 0
        %881 = vmatpush.bf16.msra.mxu0 0
        %882 = vmatpush.bf16.msra.mxu0 %v853
        %883 = vmatpush.bf16.msra.mxu0 %v851
        %884 = vmatpush.bf16.msra.mxu0 %v849
        %885 = vmatpush.bf16.msra.mxu0 %v847
        %886 = vmatmul.bf16.gmra.mxu0 %v863
        %v887 = vpop.f32.mrf.mxu0
        %v888 = vadd.f32 %v816, %v887
        %v889 = vpop.f32.mrf.mxu0
        %890 = vdwg.mxu0
        %v891 = vpack.c.bf16 %v789, %v789
        %v892 = vpack.c.bf16 %v802, %v802
        %v893 = vpack.c.bf16 %v875, %v875
        %v894 = vpack.c.bf16 %v888, %v888
        %v896 = vperm.slane %v680, 0
        %v899 = vunpack.c.l.b16 %v893
        %v900 = vpack.c.b16 %v899, %v899
        %901 = vrot.lane.b32.xlu0 %v900, 64
        %v902 = vpop.permute.xlu0 %901
        %vm903 = vcmask 64512
        %v905 = vsel %vm903, %v891, 0
        %v908 = vsel %vm903, %v902, 0
        %910 = vmatpush.bf16.xpose.msra.mxu0 0
        %911 = vmatpush.bf16.xpose.msra.mxu0 0
        %912 = vmatpush.bf16.xpose.msra.mxu0 0
        %913 = vmatpush.bf16.xpose.msra.mxu0 0
        %914 = vmatpush.bf16.xpose.msra.mxu0 0
        %915 = vmatpush.bf16.xpose.msra.mxu0 0
        %916 = vmatpush.bf16.xpose.msra.mxu0 0
        %917 = vmatpush.bf16.xpose.msra.mxu0 %v908
        %918 = vmatmul.bf16.gmra.mxu0 %v905
        %v919 = vpop.f32.mrf.mxu0
        %v920 = vadd.f32 %v896, %v919
        %v921 = vpop.f32.mrf.mxu0
        %922 = vdwg.mxu0
        %v923 = vsel %vm903, %v920, -inf
        %924 = vmax.xlane.f32.xlu0 %v923
        %v925 = vpop.xlane.xlu0 %924
        %v926 = vsub.f32 %v920, %v925
        %v927 = vmul.f32 %v926, 1.442695
        %v928 = vpow.pop %v927
        %v929 = vsel %vm903, %v928, 0.0
        %930 = vadd.xlane.f32.xlu0 %v929
        %v931 = vpop.xlane.xlu0 %930
        %v932 = vpack.c.bf16 %v928, %v928
        %v934 = vsel %vm903, %v932, 0
        %vm936 = vcmask 1043456
        %v938 = vsel %vm936, %v894, 0
        %940 = vmatpush.bf16.msra.mxu0 0
        %941 = vmatpush.bf16.msra.mxu0 0
        %942 = vmatpush.bf16.msra.mxu0 0
        %943 = vmatpush.bf16.msra.mxu0 0
        %944 = vmatpush.bf16.msra.mxu0 0
        %945 = vmatpush.bf16.msra.mxu0 0
        %946 = vmatpush.bf16.msra.mxu0 0
        %947 = vmatpush.bf16.msra.mxu0 %v938
        %948 = vmatmul.bf16.gmra.mxu0 %v934
        %v949 = vpop.f32.mrf.mxu0
        %v950 = vadd.f32 0.0, %v949
        %v951 = vpop.f32.mrf.mxu0
        %952 = vdwg.mxu0
        %v953 = vrcp.pop %v931
        %v954 = vmul.f32 %v950, %v953
        %955 = vst.msk [vmem:[#allocation2] sm:$0xff] %vm903, %v954
        %v957 = vunpack.c.l.b16 %v891
        %v958 = vpack.c.b16 %v957, %v957
        %959 = vrot.lane.b32.xlu0 %v958, 120
        %v960 = vpop.permute.xlu0 %959
        %961 = vrot.lane.b32.xlu0 %v900, 56
        %v962 = vpop.permute.xlu0 %961
        %v964 = vsel %vm903, %v960, 0
        %v967 = vsel %vm903, %v962, 0
        %969 = vmatpush.bf16.xpose.msra.mxu0 0
        %970 = vmatpush.bf16.xpose.msra.mxu0 0
        %971 = vmatpush.bf16.xpose.msra.mxu0 0
        %972 = vmatpush.bf16.xpose.msra.mxu0 0
        %973 = vmatpush.bf16.xpose.msra.mxu0 0
        %974 = vmatpush.bf16.xpose.msra.mxu0 0
        %975 = vmatpush.bf16.xpose.msra.mxu0 0
        %976 = vmatpush.bf16.xpose.msra.mxu0 %v967
        %977 = vmatmul.bf16.gmra.mxu0 %v964
        %v978 = vpop.f32.mrf.mxu0
        %v979 = vadd.f32 %v896, %v978
        %v980 = vpop.f32.mrf.mxu0
        %981 = vdwg.mxu0
        %v982 = vsel %vm903, %v979, -inf
        %983 = vmax.xlane.f32.xlu0 %v982
        %v984 = vpop.xlane.xlu0 %983
        %v985 = vsub.f32 %v979, %v984
        %v986 = vmul.f32 %v985, 1.442695
        %v987 = vpow.pop %v986
        %v988 = vsel %vm903, %v987, 0.0
        %989 = vadd.xlane.f32.xlu0 %v988
        %v990 = vpop.xlane.xlu0 %989
        %v991 = vpack.c.bf16 %v987, %v987
        %v993 = vunpack.c.l.b16 %v894
        %v994 = vpack.c.b16 %v993, %v993
        %995 = vrot.lane.b32.xlu0 %v994, 120
        %v996 = vpop.permute.xlu0 %995
        %v998 = vsel %vm903, %v991, 0
        %v1001 = vsel %vm936, %v996, 0
        %1003 = vmatpush.bf16.msra.mxu0 0
        %1004 = vmatpush.bf16.msra.mxu0 0
        %1005 = vmatpush.bf16.msra.mxu0 0
        %1006 = vmatpush.bf16.msra.mxu0 0
        %1007 = vmatpush.bf16.msra.mxu0 0
        %1008 = vmatpush.bf16.msra.mxu0 0
        %1009 = vmatpush.bf16.msra.mxu0 0
        %1010 = vmatpush.bf16.msra.mxu0 %v1001
        %1011 = vmatmul.bf16.gmra.mxu0 %v998
        %v1012 = vpop.f32.mrf.mxu0
        %v1013 = vadd.f32 0.0, %v1012
        %v1014 = vpop.f32.mrf.mxu0
        %1015 = vdwg.mxu0
        %v1016 = vrcp.pop %v990
        %v1017 = vmul.f32 %v1013, %v1016
        %1019 = vrot.lane.b32.xlu0 %v1017, 8
        %v1020 = vpop.permute.xlu0 %1019
        %vm1022 = vcmask 130112
        %1023 = vst.msk [vmem:[#allocation2] sm:$0xff] %vm1022, %v1020
        %1024 = vrot.lane.b32.xlu0 %v958, 112
        %v1025 = vpop.permute.xlu0 %1024
        %1026 = vrot.lane.b32.xlu0 %v900, 48
        %v1027 = vpop.permute.xlu0 %1026
        %v1029 = vsel %vm903, %v1025, 0
        %v1032 = vsel %vm903, %v1027, 0
        %1034 = vmatpush.bf16.xpose.msra.mxu0 0
        %1035 = vmatpush.bf16.xpose.msra.mxu0 0
        %1036 = vmatpush.bf16.xpose.msra.mxu0 0
        %1037 = vmatpush.bf16.xpose.msra.mxu0 0
        %1038 = vmatpush.bf16.xpose.msra.mxu0 0
        %1039 = vmatpush.bf16.xpose.msra.mxu0 0
        %1040 = vmatpush.bf16.xpose.msra.mxu0 0
        %1041 = vmatpush.bf16.xpose.msra.mxu0 %v1032
        %1042 = vmatmul.bf16.gmra.mxu0 %v1029
        %v1043 = vpop.f32.mrf.mxu0
        %v1044 = vadd.f32 %v896, %v1043
        %v1045 = vpop.f32.mrf.mxu0
        %1046 = vdwg.mxu0
        %v1047 = vsel %vm903, %v1044, -inf
        %1048 = vmax.xlane.f32.xlu0 %v1047
        %v1049 = vpop.xlane.xlu0 %1048
        %v1050 = vsub.f32 %v1044, %v1049
        %v1051 = vmul.f32 %v1050, 1.442695
        %v1052 = vpow.pop %v1051
        %v1053 = vsel %vm903, %v1052, 0.0
        %1054 = vadd.xlane.f32.xlu0 %v1053
        %v1055 = vpop.xlane.xlu0 %1054
        %v1056 = vpack.c.bf16 %v1052, %v1052
        %1057 = vrot.lane.b32.xlu0 %v994, 112
        %v1058 = vpop.permute.xlu0 %1057
        %v1060 = vsel %vm903, %v1056, 0
        %v1063 = vsel %vm936, %v1058, 0
        %1065 = vmatpush.bf16.msra.mxu0 0
        %1066 = vmatpush.bf16.msra.mxu0 0
        %1067 = vmatpush.bf16.msra.mxu0 0
        %1068 = vmatpush.bf16.msra.mxu0 0
        %1069 = vmatpush.bf16.msra.mxu0 0
        %1070 = vmatpush.bf16.msra.mxu0 0
        %1071 = vmatpush.bf16.msra.mxu0 0
        %1072 = vmatpush.bf16.msra.mxu0 %v1063
        %1073 = vmatmul.bf16.gmra.mxu0 %v1060
        %v1074 = vpop.f32.mrf.mxu0
        %v1075 = vadd.f32 0.0, %v1074
        %v1076 = vpop.f32.mrf.mxu0
        %1077 = vdwg.mxu0
        %v1078 = vrcp.pop %v1055
        %v1079 = vmul.f32 %v1075, %v1078
        %1081 = vrot.lane.b32.xlu0 %v1079, 16
        %v1082 = vpop.permute.xlu0 %1081
        %vm1084 = vcmask 195712
        %1085 = vst.msk [vmem:[#allocation2] sm:$0xff] %vm1084, %v1082
        %1086 = vrot.lane.b32.xlu0 %v958, 104
        %v1087 = vpop.permute.xlu0 %1086
        %1088 = vrot.lane.b32.xlu0 %v900, 40
        %v1089 = vpop.permute.xlu0 %1088
        %v1091 = vsel %vm903, %v1087, 0
        %v1094 = vsel %vm903, %v1089, 0
        %1096 = vmatpush.bf16.xpose.msra.mxu0 0
        %1097 = vmatpush.bf16.xpose.msra.mxu0 0
        %1098 = vmatpush.bf16.xpose.msra.mxu0 0
        %1099 = vmatpush.bf16.xpose.msra.mxu0 0
        %1100 = vmatpush.bf16.xpose.msra.mxu0 0
        %1101 = vmatpush.bf16.xpose.msra.mxu0 0
        %1102 = vmatpush.bf16.xpose.msra.mxu0 0
        %1103 = vmatpush.bf16.xpose.msra.mxu0 %v1094
        %1104 = vmatmul.bf16.gmra.mxu0 %v1091
        %v1105 = vpop.f32.mrf.mxu0
        %v1106 = vadd.f32 %v896, %v1105
        %v1107 = vpop.f32.mrf.mxu0
        %1108 = vdwg.mxu0
        %v1109 = vsel %vm903, %v1106, -inf
        %1110 = vmax.xlane.f32.xlu0 %v1109
        %v1111 = vpop.xlane.xlu0 %1110
        %v1112 = vsub.f32 %v1106, %v1111
        %v1113 = vmul.f32 %v1112, 1.442695
        %v1114 = vpow.pop %v1113
        %v1115 = vsel %vm903, %v1114, 0.0
        %1116 = vadd.xlane.f32.xlu0 %v1115
        %v1117 = vpop.xlane.xlu0 %1116
        %v1118 = vpack.c.bf16 %v1114, %v1114
        %1119 = vrot.lane.b32.xlu0 %v994, 104
        %v1120 = vpop.permute.xlu0 %1119
        %v1122 = vsel %vm903, %v1118, 0
        %v1125 = vsel %vm936, %v1120, 0
        %1127 = vmatpush.bf16.msra.mxu0 0
        %1128 = vmatpush.bf16.msra.mxu0 0
        %1129 = vmatpush.bf16.msra.mxu0 0
        %1130 = vmatpush.bf16.msra.mxu0 0
        %1131 = vmatpush.bf16.msra.mxu0 0
        %1132 = vmatpush.bf16.msra.mxu0 0
        %1133 = vmatpush.bf16.msra.mxu0 0
        %1134 = vmatpush.bf16.msra.mxu0 %v1125
        %1135 = vmatmul.bf16.gmra.mxu0 %v1122
        %v1136 = vpop.f32.mrf.mxu0
        %v1137 = vadd.f32 0.0, %v1136
        %v1138 = vpop.f32.mrf.mxu0
        %1139 = vdwg.mxu0
        %v1140 = vrcp.pop %v1117
        %v1141 = vmul.f32 %v1137, %v1140
        %1143 = vrot.lane.b32.xlu0 %v1141, 24
        %v1144 = vpop.permute.xlu0 %1143
        %vm1146 = vcmask 261312
        %1147 = vst.msk [vmem:[#allocation2] sm:$0xff] %vm1146, %v1144
        %1148 = vrot.lane.b32.xlu0 %v958, 96
        %v1149 = vpop.permute.xlu0 %1148
        %1150 = vrot.lane.b32.xlu0 %v900, 32
        %v1151 = vpop.permute.xlu0 %1150
        %v1153 = vsel %vm903, %v1149, 0
        %v1156 = vsel %vm903, %v1151, 0
        %1158 = vmatpush.bf16.xpose.msra.mxu0 0
        %1159 = vmatpush.bf16.xpose.msra.mxu0 0
        %1160 = vmatpush.bf16.xpose.msra.mxu0 0
        %1161 = vmatpush.bf16.xpose.msra.mxu0 0
        %1162 = vmatpush.bf16.xpose.msra.mxu0 0
        %1163 = vmatpush.bf16.xpose.msra.mxu0 0
        %1164 = vmatpush.bf16.xpose.msra.mxu0 0
        %1165 = vmatpush.bf16.xpose.msra.mxu0 %v1156
        %1166 = vmatmul.bf16.gmra.mxu0 %v1153
        %v1167 = vpop.f32.mrf.mxu0
        %v1168 = vadd.f32 %v896, %v1167
        %v1169 = vpop.f32.mrf.mxu0
        %1170 = vdwg.mxu0
        %v1171 = vsel %vm903, %v1168, -inf
        %1172 = vmax.xlane.f32.xlu0 %v1171
        %v1173 = vpop.xlane.xlu0 %1172
        %v1174 = vsub.f32 %v1168, %v1173
        %v1175 = vmul.f32 %v1174, 1.442695
        %v1176 = vpow.pop %v1175
        %v1177 = vsel %vm903, %v1176, 0.0
        %1178 = vadd.xlane.f32.xlu0 %v1177
        %v1179 = vpop.xlane.xlu0 %1178
        %v1180 = vpack.c.bf16 %v1176, %v1176
        %1181 = vrot.lane.b32.xlu0 %v994, 96
        %v1182 = vpop.permute.xlu0 %1181
        %v1184 = vsel %vm903, %v1180, 0
        %v1187 = vsel %vm936, %v1182, 0
        %1189 = vmatpush.bf16.msra.mxu0 0
        %1190 = vmatpush.bf16.msra.mxu0 0
        %1191 = vmatpush.bf16.msra.mxu0 0
        %1192 = vmatpush.bf16.msra.mxu0 0
        %1193 = vmatpush.bf16.msra.mxu0 0
        %1194 = vmatpush.bf16.msra.mxu0 0
        %1195 = vmatpush.bf16.msra.mxu0 0
        %1196 = vmatpush.bf16.msra.mxu0 %v1187
        %1197 = vmatmul.bf16.gmra.mxu0 %v1184
        %v1198 = vpop.f32.mrf.mxu0
        %v1199 = vadd.f32 0.0, %v1198
        %v1200 = vpop.f32.mrf.mxu0
        %1201 = vdwg.mxu0
        %v1202 = vrcp.pop %v1179
        %v1203 = vmul.f32 %v1199, %v1202
        %1205 = vrot.lane.b32.xlu0 %v1203, 32
        %v1206 = vpop.permute.xlu0 %1205
        %vm1208 = vcmask 326912
        %1209 = vst.msk [vmem:[#allocation2] sm:$0xff] %vm1208, %v1206
        %1210 = vrot.lane.b32.xlu0 %v958, 88
        %v1211 = vpop.permute.xlu0 %1210
        %1212 = vrot.lane.b32.xlu0 %v900, 24
        %v1213 = vpop.permute.xlu0 %1212
        %v1215 = vsel %vm903, %v1211, 0
        %v1218 = vsel %vm903, %v1213, 0
        %1220 = vmatpush.bf16.xpose.msra.mxu0 0
        %1221 = vmatpush.bf16.xpose.msra.mxu0 0
        %1222 = vmatpush.bf16.xpose.msra.mxu0 0
        %1223 = vmatpush.bf16.xpose.msra.mxu0 0
        %1224 = vmatpush.bf16.xpose.msra.mxu0 0
        %1225 = vmatpush.bf16.xpose.msra.mxu0 0
        %1226 = vmatpush.bf16.xpose.msra.mxu0 0
        %1227 = vmatpush.bf16.xpose.msra.mxu0 %v1218
        %1228 = vmatmul.bf16.gmra.mxu0 %v1215
        %v1229 = vpop.f32.mrf.mxu0
        %v1230 = vadd.f32 %v896, %v1229
        %v1231 = vpop.f32.mrf.mxu0
        %1232 = vdwg.mxu0
        %v1233 = vsel %vm903, %v1230, -inf
        %1234 = vmax.xlane.f32.xlu0 %v1233
        %v1235 = vpop.xlane.xlu0 %1234
        %v1236 = vsub.f32 %v1230, %v1235
        %v1237 = vmul.f32 %v1236, 1.442695
        %v1238 = vpow.pop %v1237
        %v1239 = vsel %vm903, %v1238, 0.0
        %1240 = vadd.xlane.f32.xlu0 %v1239
        %v1241 = vpop.xlane.xlu0 %1240
        %v1242 = vpack.c.bf16 %v1238, %v1238
        %1243 = vrot.lane.b32.xlu0 %v994, 88
        %v1244 = vpop.permute.xlu0 %1243
        %v1246 = vsel %vm903, %v1242, 0
        %v1249 = vsel %vm936, %v1244, 0
        %1251 = vmatpush.bf16.msra.mxu0 0
        %1252 = vmatpush.bf16.msra.mxu0 0
        %1253 = vmatpush.bf16.msra.mxu0 0
        %1254 = vmatpush.bf16.msra.mxu0 0
        %1255 = vmatpush.bf16.msra.mxu0 0
        %1256 = vmatpush.bf16.msra.mxu0 0
        %1257 = vmatpush.bf16.msra.mxu0 0
        %1258 = vmatpush.bf16.msra.mxu0 %v1249
        %1259 = vmatmul.bf16.gmra.mxu0 %v1246
        %v1260 = vpop.f32.mrf.mxu0
        %v1261 = vadd.f32 0.0, %v1260
        %v1262 = vpop.f32.mrf.mxu0
        %1263 = vdwg.mxu0
        %v1264 = vrcp.pop %v1241
        %v1265 = vmul.f32 %v1261, %v1264
        %1267 = vrot.lane.b32.xlu0 %v1265, 40
        %v1268 = vpop.permute.xlu0 %1267
        %vm1270 = vcmask 392512
        %1271 = vst.msk [vmem:[#allocation2] sm:$0xff] %vm1270, %v1268
        %1272 = vrot.lane.b32.xlu0 %v958, 80
        %v1273 = vpop.permute.xlu0 %1272
        %1274 = vrot.lane.b32.xlu0 %v900, 16
        %v1275 = vpop.permute.xlu0 %1274
        %v1277 = vsel %vm903, %v1273, 0
        %v1280 = vsel %vm903, %v1275, 0
        %1282 = vmatpush.bf16.xpose.msra.mxu0 0
        %1283 = vmatpush.bf16.xpose.msra.mxu0 0
        %1284 = vmatpush.bf16.xpose.msra.mxu0 0
        %1285 = vmatpush.bf16.xpose.msra.mxu0 0
        %1286 = vmatpush.bf16.xpose.msra.mxu0 0
        %1287 = vmatpush.bf16.xpose.msra.mxu0 0
        %1288 = vmatpush.bf16.xpose.msra.mxu0 0
        %1289 = vmatpush.bf16.xpose.msra.mxu0 %v1280
        %1290 = vmatmul.bf16.gmra.mxu0 %v1277
        %v1291 = vpop.f32.mrf.mxu0
        %v1292 = vadd.f32 %v896, %v1291
        %v1293 = vpop.f32.mrf.mxu0
        %1294 = vdwg.mxu0
        %v1295 = vsel %vm903, %v1292, -inf
        %1296 = vmax.xlane.f32.xlu0 %v1295
        %v1297 = vpop.xlane.xlu0 %1296
        %v1298 = vsub.f32 %v1292, %v1297
        %v1299 = vmul.f32 %v1298, 1.442695
        %v1300 = vpow.pop %v1299
        %v1301 = vsel %vm903, %v1300, 0.0
        %1302 = vadd.xlane.f32.xlu0 %v1301
        %v1303 = vpop.xlane.xlu0 %1302
        %v1304 = vpack.c.bf16 %v1300, %v1300
        %1305 = vrot.lane.b32.xlu0 %v994, 80
        %v1306 = vpop.permute.xlu0 %1305
        %v1308 = vsel %vm903, %v1304, 0
        %v1311 = vsel %vm936, %v1306, 0
        %1313 = vmatpush.bf16.msra.mxu0 0
        %1314 = vmatpush.bf16.msra.mxu0 0
        %1315 = vmatpush.bf16.msra.mxu0 0
        %1316 = vmatpush.bf16.msra.mxu0 0
        %1317 = vmatpush.bf16.msra.mxu0 0
        %1318 = vmatpush.bf16.msra.mxu0 0
        %1319 = vmatpush.bf16.msra.mxu0 0
        %1320 = vmatpush.bf16.msra.mxu0 %v1311
        %1321 = vmatmul.bf16.gmra.mxu0 %v1308
        %v1322 = vpop.f32.mrf.mxu0
        %v1323 = vadd.f32 0.0, %v1322
        %v1324 = vpop.f32.mrf.mxu0
        %1325 = vdwg.mxu0
        %v1326 = vrcp.pop %v1303
        %v1327 = vmul.f32 %v1323, %v1326
        %1329 = vrot.lane.b32.xlu0 %v1327, 48
        %v1330 = vpop.permute.xlu0 %1329
        %vm1332 = vcmask 458112
        %1333 = vst.msk [vmem:[#allocation2] sm:$0xff] %vm1332, %v1330
        %1334 = vrot.lane.b32.xlu0 %v958, 72
        %v1335 = vpop.permute.xlu0 %1334
        %1336 = vrot.lane.b32.xlu0 %v900, 8
        %v1337 = vpop.permute.xlu0 %1336
        %v1339 = vsel %vm903, %v1335, 0
        %v1342 = vsel %vm903, %v1337, 0
        %1344 = vmatpush.bf16.xpose.msra.mxu0 0
        %1345 = vmatpush.bf16.xpose.msra.mxu0 0
        %1346 = vmatpush.bf16.xpose.msra.mxu0 0
        %1347 = vmatpush.bf16.xpose.msra.mxu0 0
        %1348 = vmatpush.bf16.xpose.msra.mxu0 0
        %1349 = vmatpush.bf16.xpose.msra.mxu0 0
        %1350 = vmatpush.bf16.xpose.msra.mxu0 0
        %1351 = vmatpush.bf16.xpose.msra.mxu0 %v1342
        %1352 = vmatmul.bf16.gmra.mxu0 %v1339
        %v1353 = vpop.f32.mrf.mxu0
        %v1354 = vadd.f32 %v896, %v1353
        %v1355 = vpop.f32.mrf.mxu0
        %1356 = vdwg.mxu0
        %v1357 = vsel %vm903, %v1354, -inf
        %1358 = vmax.xlane.f32.xlu0 %v1357
        %v1359 = vpop.xlane.xlu0 %1358
        %v1360 = vsub.f32 %v1354, %v1359
        %v1361 = vmul.f32 %v1360, 1.442695
        %v1362 = vpow.pop %v1361
        %v1363 = vsel %vm903, %v1362, 0.0
        %1364 = vadd.xlane.f32.xlu0 %v1363
        %v1365 = vpop.xlane.xlu0 %1364
        %v1366 = vpack.c.bf16 %v1362, %v1362
        %1367 = vrot.lane.b32.xlu0 %v994, 72
        %v1368 = vpop.permute.xlu0 %1367
        %v1370 = vsel %vm903, %v1366, 0
        %v1373 = vsel %vm936, %v1368, 0
        %1375 = vmatpush.bf16.msra.mxu0 0
        %1376 = vmatpush.bf16.msra.mxu0 0
        %1377 = vmatpush.bf16.msra.mxu0 0
        %1378 = vmatpush.bf16.msra.mxu0 0
        %1379 = vmatpush.bf16.msra.mxu0 0
        %1380 = vmatpush.bf16.msra.mxu0 0
        %1381 = vmatpush.bf16.msra.mxu0 0
        %1382 = vmatpush.bf16.msra.mxu0 %v1373
        %1383 = vmatmul.bf16.gmra.mxu0 %v1370
        %v1384 = vpop.f32.mrf.mxu0
        %v1385 = vadd.f32 0.0, %v1384
        %v1386 = vpop.f32.mrf.mxu0
        %1387 = vdwg.mxu0
        %v1388 = vrcp.pop %v1365
        %v1389 = vmul.f32 %v1385, %v1388
        %1391 = vrot.lane.b32.xlu0 %v1389, 56
        %v1392 = vpop.permute.xlu0 %1391
        %vm1394 = vcmask 523712
        %1395 = vst.msk [vmem:[#allocation2] sm:$0xff] %vm1394, %v1392
        %v1396 = vld [vmem:[#allocation2] sm:$0xff]
        %v1397 = vpack.c.bf16 %v1396, %v1396
        %v1398 = vld [vmem:[#allocation14] sm:$0xf]
        %v1399 = vld [vmem:[#allocation14 + $0x4] sm:$0xf]
        %v1400 = vld [vmem:[#allocation14 + $0x8] sm:$0xf]
        %v1401 = vld [vmem:[#allocation14 + $0xc] sm:$0xf]
        %v1402 = vld [vmem:[#allocation14 + $0x10] sm:$0xf]
        %v1403 = vld [vmem:[#allocation14 + $0x14] sm:$0xf]
        %v1404 = vld [vmem:[#allocation14 + $0x18] sm:$0xf]
        %v1405 = vld [vmem:[#allocation14 + $0x1c] sm:$0xf]
        %v1406 = vld [vmem:[%s9] sm:$0x1]
        %v1408 = vperm.slane %v1406, 0
        %v1418 = vunpack.c.l.b16 %v1398
        %v1419 = vunpack.c.l.b16 %v1399
        %v1420 = vunpack.c.l.b16 %v1400
        %v1421 = vunpack.c.l.b16 %v1401
        %v1422 = vunpack.c.l.b16 %v1402
        %v1423 = vunpack.c.l.b16 %v1403
        %v1424 = vunpack.c.l.b16 %v1404
        %v1425 = vunpack.c.l.b16 %v1405
        %v1426 = vpack.c.b16 %v1419, %v1418
        %v1427 = vpack.c.b16 %v1421, %v1420
        %v1428 = vpack.c.b16 %v1423, %v1422
        %v1429 = vpack.c.b16 %v1425, %v1424
        %v1435 = vsel %vm775, %v1397, 0
        %1437 = vmatpush.bf16.msra.mxu0 0
        %1438 = vmatpush.bf16.msra.mxu0 0
        %1439 = vmatpush.bf16.msra.mxu0 0
        %1440 = vmatpush.bf16.msra.mxu0 0
        %1441 = vmatpush.bf16.msra.mxu0 %v1429
        %1442 = vmatpush.bf16.msra.mxu0 %v1428
        %1443 = vmatpush.bf16.msra.mxu0 %v1427
        %1444 = vmatpush.bf16.msra.mxu0 %v1426
        %1445 = vmatmul.bf16.gmra.mxu0 %v1435
        %v1446 = vpop.f32.mrf.mxu0
        %v1447 = vadd.f32 %v1408, %v1446
        %v1448 = vpop.f32.mrf.mxu0
        %1449 = vdwg.mxu0
        %1450 = vrot.lane.b32.xlu0 %v958, 64
        %v1451 = vpop.permute.xlu0 %1450
        %v1453 = vsel %vm903, %v893, 0
        %v1456 = vsel %vm903, %v1451, 0
        %1458 = vmatpush.bf16.xpose.msra.mxu0 0
        %1459 = vmatpush.bf16.xpose.msra.mxu0 0
        %1460 = vmatpush.bf16.xpose.msra.mxu0 0
        %1461 = vmatpush.bf16.xpose.msra.mxu0 0
        %1462 = vmatpush.bf16.xpose.msra.mxu0 0
        %1463 = vmatpush.bf16.xpose.msra.mxu0 0
        %1464 = vmatpush.bf16.xpose.msra.mxu0 0
        %1465 = vmatpush.bf16.xpose.msra.mxu0 %v1456
        %1466 = vmatmul.bf16.gmra.mxu0 %v1453
        %v1467 = vpop.f32.mrf.mxu0
        %v1468 = vadd.f32 %v896, %v1467
        %v1469 = vpop.f32.mrf.mxu0
        %1470 = vdwg.mxu0
        %v1471 = vsel %vm903, %v1468, -inf
        %1472 = vmax.xlane.f32.xlu0 %v1471
        %v1473 = vpop.xlane.xlu0 %1472
        %v1474 = vsub.f32 %v1468, %v1473
        %v1475 = vmul.f32 %v1474, 1.442695
        %v1476 = vpow.pop %v1475
        %v1477 = vsel %vm903, %v1476, 0.0
        %1478 = vadd.xlane.f32.xlu0 %v1477
        %v1479 = vpop.xlane.xlu0 %1478
        %v1480 = vpack.c.bf16 %v1476, %v1476
        %v1482 = vsel %vm903, %v1480, 0
        %v1485 = vsel %vm936, %v892, 0
        %1487 = vmatpush.bf16.msra.mxu0 0
        %1488 = vmatpush.bf16.msra.mxu0 0
        %1489 = vmatpush.bf16.msra.mxu0 0
        %1490 = vmatpush.bf16.msra.mxu0 0
        %1491 = vmatpush.bf16.msra.mxu0 0
        %1492 = vmatpush.bf16.msra.mxu0 0
        %1493 = vmatpush.bf16.msra.mxu0 0
        %1494 = vmatpush.bf16.msra.mxu0 %v1485
        %1495 = vmatmul.bf16.gmra.mxu0 %v1482
        %v1496 = vpop.f32.mrf.mxu0
        %v1497 = vadd.f32 0.0, %v1496
        %v1498 = vpop.f32.mrf.mxu0
        %1499 = vdwg.mxu0
        %v1500 = vrcp.pop %v1479
        %v1501 = vmul.f32 %v1497, %v1500
        %1502 = vst.msk [vmem:[#allocation2] sm:$0xff] %vm903, %v1501
        %1503 = vrot.lane.b32.xlu0 %v900, 120
        %v1504 = vpop.permute.xlu0 %1503
        %1505 = vrot.lane.b32.xlu0 %v958, 56
        %v1506 = vpop.permute.xlu0 %1505
        %v1508 = vsel %vm903, %v1504, 0
        %v1511 = vsel %vm903, %v1506, 0
        %1513 = vmatpush.bf16.xpose.msra.mxu0 0
        %1514 = vmatpush.bf16.xpose.msra.mxu0 0
        %1515 = vmatpush.bf16.xpose.msra.mxu0 0
        %1516 = vmatpush.bf16.xpose.msra.mxu0 0
        %1517 = vmatpush.bf16.xpose.msra.mxu0 0
        %1518 = vmatpush.bf16.xpose.msra.mxu0 0
        %1519 = vmatpush.bf16.xpose.msra.mxu0 0
        %1520 = vmatpush.bf16.xpose.msra.mxu0 %v1511
        %1521 = vmatmul.bf16.gmra.mxu0 %v1508
        %v1522 = vpop.f32.mrf.mxu0
        %v1523 = vadd.f32 %v896, %v1522
        %v1524 = vpop.f32.mrf.mxu0
        %1525 = vdwg.mxu0
        %v1526 = vsel %vm903, %v1523, -inf
        %1527 = vmax.xlane.f32.xlu0 %v1526
        %v1528 = vpop.xlane.xlu0 %1527
        %v1529 = vsub.f32 %v1523, %v1528
        %v1530 = vmul.f32 %v1529, 1.442695
        %v1531 = vpow.pop %v1530
        %v1532 = vsel %vm903, %v1531, 0.0
        %1533 = vadd.xlane.f32.xlu0 %v1532
        %v1534 = vpop.xlane.xlu0 %1533
        %v1535 = vpack.c.bf16 %v1531, %v1531
        %v1537 = vunpack.c.l.b16 %v892
        %v1538 = vpack.c.b16 %v1537, %v1537
        %1539 = vrot.lane.b32.xlu0 %v1538, 120
        %v1540 = vpop.permute.xlu0 %1539
        %v1542 = vsel %vm903, %v1535, 0
        %v1545 = vsel %vm936, %v1540, 0
        %1547 = vmatpush.bf16.msra.mxu0 0
        %1548 = vmatpush.bf16.msra.mxu0 0
        %1549 = vmatpush.bf16.msra.mxu0 0
        %1550 = vmatpush.bf16.msra.mxu0 0
        %1551 = vmatpush.bf16.msra.mxu0 0
        %1552 = vmatpush.bf16.msra.mxu0 0
        %1553 = vmatpush.bf16.msra.mxu0 0
        %1554 = vmatpush.bf16.msra.mxu0 %v1545
        %1555 = vmatmul.bf16.gmra.mxu0 %v1542
        %v1556 = vpop.f32.mrf.mxu0
        %v1557 = vadd.f32 0.0, %v1556
        %v1558 = vpop.f32.mrf.mxu0
        %1559 = vdwg.mxu0
        %v1560 = vrcp.pop %v1534
        %v1561 = vmul.f32 %v1557, %v1560
        %1563 = vrot.lane.b32.xlu0 %v1561, 8
        %v1564 = vpop.permute.xlu0 %1563
        %1566 = vst.msk [vmem:[#allocation2] sm:$0xff] %vm1022, %v1564
        %1567 = vrot.lane.b32.xlu0 %v900, 112
        %v1568 = vpop.permute.xlu0 %1567
        %1569 = vrot.lane.b32.xlu0 %v958, 48
        %v1570 = vpop.permute.xlu0 %1569
        %v1572 = vsel %vm903, %v1568, 0
        %v1575 = vsel %vm903, %v1570, 0
        %1577 = vmatpush.bf16.xpose.msra.mxu0 0
        %1578 = vmatpush.bf16.xpose.msra.mxu0 0
        %1579 = vmatpush.bf16.xpose.msra.mxu0 0
        %1580 = vmatpush.bf16.xpose.msra.mxu0 0
        %1581 = vmatpush.bf16.xpose.msra.mxu0 0
        %1582 = vmatpush.bf16.xpose.msra.mxu0 0
        %1583 = vmatpush.bf16.xpose.msra.mxu0 0
        %1584 = vmatpush.bf16.xpose.msra.mxu0 %v1575
        %1585 = vmatmul.bf16.gmra.mxu0 %v1572
        %v1586 = vpop.f32.mrf.mxu0
        %v1587 = vadd.f32 %v896, %v1586
        %v1588 = vpop.f32.mrf.mxu0
        %1589 = vdwg.mxu0
        %v1590 = vsel %vm903, %v1587, -inf
        %1591 = vmax.xlane.f32.xlu0 %v1590
        %v1592 = vpop.xlane.xlu0 %1591
        %v1593 = vsub.f32 %v1587, %v1592
        %v1594 = vmul.f32 %v1593, 1.442695
        %v1595 = vpow.pop %v1594
        %v1596 = vsel %vm903, %v1595, 0.0
        %1597 = vadd.xlane.f32.xlu0 %v1596
        %v1598 = vpop.xlane.xlu0 %1597
        %v1599 = vpack.c.bf16 %v1595, %v1595
        %1600 = vrot.lane.b32.xlu0 %v1538, 112
        %v1601 = vpop.permute.xlu0 %1600
        %v1603 = vsel %vm903, %v1599, 0
        %v1606 = vsel %vm936, %v1601, 0
        %1608 = vmatpush.bf16.msra.mxu0 0
        %1609 = vmatpush.bf16.msra.mxu0 0
        %1610 = vmatpush.bf16.msra.mxu0 0
        %1611 = vmatpush.bf16.msra.mxu0 0
        %1612 = vmatpush.bf16.msra.mxu0 0
        %1613 = vmatpush.bf16.msra.mxu0 0
        %1614 = vmatpush.bf16.msra.mxu0 0
        %1615 = vmatpush.bf16.msra.mxu0 %v1606
        %1616 = vmatmul.bf16.gmra.mxu0 %v1603
        %v1617 = vpop.f32.mrf.mxu0
        %v1618 = vadd.f32 0.0, %v1617
        %v1619 = vpop.f32.mrf.mxu0
        %1620 = vdwg.mxu0
        %v1621 = vrcp.pop %v1598
        %v1622 = vmul.f32 %v1618, %v1621
        %1624 = vrot.lane.b32.xlu0 %v1622, 16
        %v1625 = vpop.permute.xlu0 %1624
        %1627 = vst.msk [vmem:[#allocation2] sm:$0xff] %vm1084, %v1625
        %1628 = vrot.lane.b32.xlu0 %v900, 104
        %v1629 = vpop.permute.xlu0 %1628
        %1630 = vrot.lane.b32.xlu0 %v958, 40
        %v1631 = vpop.permute.xlu0 %1630
        %v1633 = vsel %vm903, %v1629, 0
        %v1636 = vsel %vm903, %v1631, 0
        %1638 = vmatpush.bf16.xpose.msra.mxu0 0
        %1639 = vmatpush.bf16.xpose.msra.mxu0 0
        %1640 = vmatpush.bf16.xpose.msra.mxu0 0
        %1641 = vmatpush.bf16.xpose.msra.mxu0 0
        %1642 = vmatpush.bf16.xpose.msra.mxu0 0
        %1643 = vmatpush.bf16.xpose.msra.mxu0 0
        %1644 = vmatpush.bf16.xpose.msra.mxu0 0
        %1645 = vmatpush.bf16.xpose.msra.mxu0 %v1636
        %1646 = vmatmul.bf16.gmra.mxu0 %v1633
        %v1647 = vpop.f32.mrf.mxu0
        %v1648 = vadd.f32 %v896, %v1647
        %v1649 = vpop.f32.mrf.mxu0
        %1650 = vdwg.mxu0
        %v1651 = vsel %vm903, %v1648, -inf
        %1652 = vmax.xlane.f32.xlu0 %v1651
        %v1653 = vpop.xlane.xlu0 %1652
        %v1654 = vsub.f32 %v1648, %v1653
        %v1655 = vmul.f32 %v1654, 1.442695
        %v1656 = vpow.pop %v1655
        %v1657 = vsel %vm903, %v1656, 0.0
        %1658 = vadd.xlane.f32.xlu0 %v1657
        %v1659 = vpop.xlane.xlu0 %1658
        %v1660 = vpack.c.bf16 %v1656, %v1656
        %1661 = vrot.lane.b32.xlu0 %v1538, 104
        %v1662 = vpop.permute.xlu0 %1661
        %v1664 = vsel %vm903, %v1660, 0
        %v1667 = vsel %vm936, %v1662, 0
        %1669 = vmatpush.bf16.msra.mxu0 0
        %1670 = vmatpush.bf16.msra.mxu0 0
        %1671 = vmatpush.bf16.msra.mxu0 0
        %1672 = vmatpush.bf16.msra.mxu0 0
        %1673 = vmatpush.bf16.msra.mxu0 0
        %1674 = vmatpush.bf16.msra.mxu0 0
        %1675 = vmatpush.bf16.msra.mxu0 0
        %1676 = vmatpush.bf16.msra.mxu0 %v1667
        %1677 = vmatmul.bf16.gmra.mxu0 %v1664
        %v1678 = vpop.f32.mrf.mxu0
        %v1679 = vadd.f32 0.0, %v1678
        %v1680 = vpop.f32.mrf.mxu0
        %1681 = vdwg.mxu0
        %v1682 = vrcp.pop %v1659
        %v1683 = vmul.f32 %v1679, %v1682
        %1685 = vrot.lane.b32.xlu0 %v1683, 24
        %v1686 = vpop.permute.xlu0 %1685
        %1688 = vst.msk [vmem:[#allocation2] sm:$0xff] %vm1146, %v1686
        %1689 = vrot.lane.b32.xlu0 %v900, 96
        %v1690 = vpop.permute.xlu0 %1689
        %1691 = vrot.lane.b32.xlu0 %v958, 32
        %v1692 = vpop.permute.xlu0 %1691
        %v1694 = vsel %vm903, %v1690, 0
        %v1697 = vsel %vm903, %v1692, 0
        %1699 = vmatpush.bf16.xpose.msra.mxu0 0
        %1700 = vmatpush.bf16.xpose.msra.mxu0 0
        %1701 = vmatpush.bf16.xpose.msra.mxu0 0
        %1702 = vmatpush.bf16.xpose.msra.mxu0 0
        %1703 = vmatpush.bf16.xpose.msra.mxu0 0
        %1704 = vmatpush.bf16.xpose.msra.mxu0 0
        %1705 = vmatpush.bf16.xpose.msra.mxu0 0
        %1706 = vmatpush.bf16.xpose.msra.mxu0 %v1697
        %1707 = vmatmul.bf16.gmra.mxu0 %v1694
        %v1708 = vpop.f32.mrf.mxu0
        %v1709 = vadd.f32 %v896, %v1708
        %v1710 = vpop.f32.mrf.mxu0
        %1711 = vdwg.mxu0
        %v1712 = vsel %vm903, %v1709, -inf
        %1713 = vmax.xlane.f32.xlu0 %v1712
        %v1714 = vpop.xlane.xlu0 %1713
        %v1715 = vsub.f32 %v1709, %v1714
        %v1716 = vmul.f32 %v1715, 1.442695
        %v1717 = vpow.pop %v1716
        %v1718 = vsel %vm903, %v1717, 0.0
        %1719 = vadd.xlane.f32.xlu0 %v1718
        %v1720 = vpop.xlane.xlu0 %1719
        %v1721 = vpack.c.bf16 %v1717, %v1717
        %1722 = vrot.lane.b32.xlu0 %v1538, 96
        %v1723 = vpop.permute.xlu0 %1722
        %v1725 = vsel %vm903, %v1721, 0
        %v1728 = vsel %vm936, %v1723, 0
        %1730 = vmatpush.bf16.msra.mxu0 0
        %1731 = vmatpush.bf16.msra.mxu0 0
        %1732 = vmatpush.bf16.msra.mxu0 0
        %1733 = vmatpush.bf16.msra.mxu0 0
        %1734 = vmatpush.bf16.msra.mxu0 0
        %1735 = vmatpush.bf16.msra.mxu0 0
        %1736 = vmatpush.bf16.msra.mxu0 0
        %1737 = vmatpush.bf16.msra.mxu0 %v1728
        %1738 = vmatmul.bf16.gmra.mxu0 %v1725
        %v1739 = vpop.f32.mrf.mxu0
        %v1740 = vadd.f32 0.0, %v1739
        %v1741 = vpop.f32.mrf.mxu0
        %1742 = vdwg.mxu0
        %v1743 = vrcp.pop %v1720
        %v1744 = vmul.f32 %v1740, %v1743
        %1746 = vrot.lane.b32.xlu0 %v1744, 32
        %v1747 = vpop.permute.xlu0 %1746
        %1749 = vst.msk [vmem:[#allocation2] sm:$0xff] %vm1208, %v1747
        %1750 = vrot.lane.b32.xlu0 %v900, 88
        %v1751 = vpop.permute.xlu0 %1750
        %1752 = vrot.lane.b32.xlu0 %v958, 24
        %v1753 = vpop.permute.xlu0 %1752
        %v1755 = vsel %vm903, %v1751, 0
        %v1758 = vsel %vm903, %v1753, 0
        %1760 = vmatpush.bf16.xpose.msra.mxu0 0
        %1761 = vmatpush.bf16.xpose.msra.mxu0 0
        %1762 = vmatpush.bf16.xpose.msra.mxu0 0
        %1763 = vmatpush.bf16.xpose.msra.mxu0 0
        %1764 = vmatpush.bf16.xpose.msra.mxu0 0
        %1765 = vmatpush.bf16.xpose.msra.mxu0 0
        %1766 = vmatpush.bf16.xpose.msra.mxu0 0
        %1767 = vmatpush.bf16.xpose.msra.mxu0 %v1758
        %1768 = vmatmul.bf16.gmra.mxu0 %v1755
        %v1769 = vpop.f32.mrf.mxu0
        %v1770 = vadd.f32 %v896, %v1769
        %v1771 = vpop.f32.mrf.mxu0
        %1772 = vdwg.mxu0
        %v1773 = vsel %vm903, %v1770, -inf
        %1774 = vmax.xlane.f32.xlu0 %v1773
        %v1775 = vpop.xlane.xlu0 %1774
        %v1776 = vsub.f32 %v1770, %v1775
        %v1777 = vmul.f32 %v1776, 1.442695
        %v1778 = vpow.pop %v1777
        %v1779 = vsel %vm903, %v1778, 0.0
        %1780 = vadd.xlane.f32.xlu0 %v1779
        %v1781 = vpop.xlane.xlu0 %1780
        %v1782 = vpack.c.bf16 %v1778, %v1778
        %1783 = vrot.lane.b32.xlu0 %v1538, 88
        %v1784 = vpop.permute.xlu0 %1783
        %v1786 = vsel %vm903, %v1782, 0
        %v1789 = vsel %vm936, %v1784, 0
        %1791 = vmatpush.bf16.msra.mxu0 0
        %1792 = vmatpush.bf16.msra.mxu0 0
        %1793 = vmatpush.bf16.msra.mxu0 0
        %1794 = vmatpush.bf16.msra.mxu0 0
        %1795 = vmatpush.bf16.msra.mxu0 0
        %1796 = vmatpush.bf16.msra.mxu0 0
        %1797 = vmatpush.bf16.msra.mxu0 0
        %1798 = vmatpush.bf16.msra.mxu0 %v1789
        %1799 = vmatmul.bf16.gmra.mxu0 %v1786
        %v1800 = vpop.f32.mrf.mxu0
        %v1801 = vadd.f32 0.0, %v1800
        %v1802 = vpop.f32.mrf.mxu0
        %1803 = vdwg.mxu0
        %v1804 = vrcp.pop %v1781
        %v1805 = vmul.f32 %v1801, %v1804
        %1807 = vrot.lane.b32.xlu0 %v1805, 40
        %v1808 = vpop.permute.xlu0 %1807
        %1810 = vst.msk [vmem:[#allocation2] sm:$0xff] %vm1270, %v1808
        %1811 = vrot.lane.b32.xlu0 %v900, 80
        %v1812 = vpop.permute.xlu0 %1811
        %1813 = vrot.lane.b32.xlu0 %v958, 16
        %v1814 = vpop.permute.xlu0 %1813
        %v1816 = vsel %vm903, %v1812, 0
        %v1819 = vsel %vm903, %v1814, 0
        %1821 = vmatpush.bf16.xpose.msra.mxu0 0
        %1822 = vmatpush.bf16.xpose.msra.mxu0 0
        %1823 = vmatpush.bf16.xpose.msra.mxu0 0
        %1824 = vmatpush.bf16.xpose.msra.mxu0 0
        %1825 = vmatpush.bf16.xpose.msra.mxu0 0
        %1826 = vmatpush.bf16.xpose.msra.mxu0 0
        %1827 = vmatpush.bf16.xpose.msra.mxu0 0
        %1828 = vmatpush.bf16.xpose.msra.mxu0 %v1819
        %1829 = vmatmul.bf16.gmra.mxu0 %v1816
        %v1830 = vpop.f32.mrf.mxu0
        %v1831 = vadd.f32 %v896, %v1830
        %v1832 = vpop.f32.mrf.mxu0
        %1833 = vdwg.mxu0
        %v1834 = vsel %vm903, %v1831, -inf
        %1835 = vmax.xlane.f32.xlu0 %v1834
        %v1836 = vpop.xlane.xlu0 %1835
        %v1837 = vsub.f32 %v1831, %v1836
        %v1838 = vmul.f32 %v1837, 1.442695
        %v1839 = vpow.pop %v1838
        %v1840 = vsel %vm903, %v1839, 0.0
        %1841 = vadd.xlane.f32.xlu0 %v1840
        %v1842 = vpop.xlane.xlu0 %1841
        %v1843 = vpack.c.bf16 %v1839, %v1839
        %1844 = vrot.lane.b32.xlu0 %v1538, 80
        %v1845 = vpop.permute.xlu0 %1844
        %v1847 = vsel %vm903, %v1843, 0
        %v1850 = vsel %vm936, %v1845, 0
        %1852 = vmatpush.bf16.msra.mxu0 0
        %1853 = vmatpush.bf16.msra.mxu0 0
        %1854 = vmatpush.bf16.msra.mxu0 0
        %1855 = vmatpush.bf16.msra.mxu0 0
        %1856 = vmatpush.bf16.msra.mxu0 0
        %1857 = vmatpush.bf16.msra.mxu0 0
        %1858 = vmatpush.bf16.msra.mxu0 0
        %1859 = vmatpush.bf16.msra.mxu0 %v1850
        %1860 = vmatmul.bf16.gmra.mxu0 %v1847
        %v1861 = vpop.f32.mrf.mxu0
        %v1862 = vadd.f32 0.0, %v1861
        %v1863 = vpop.f32.mrf.mxu0
        %1864 = vdwg.mxu0
        %v1865 = vrcp.pop %v1842
        %v1866 = vmul.f32 %v1862, %v1865
        %1868 = vrot.lane.b32.xlu0 %v1866, 48
        %v1869 = vpop.permute.xlu0 %1868
        %1871 = vst.msk [vmem:[#allocation2] sm:$0xff] %vm1332, %v1869
        %1872 = vrot.lane.b32.xlu0 %v900, 72
        %v1873 = vpop.permute.xlu0 %1872
        %1874 = vrot.lane.b32.xlu0 %v958, 8
        %v1875 = vpop.permute.xlu0 %1874
        %v1877 = vsel %vm903, %v1873, 0
        %v1880 = vsel %vm903, %v1875, 0
        %1882 = vmatpush.bf16.xpose.msra.mxu0 0
        %1883 = vmatpush.bf16.xpose.msra.mxu0 0
        %1884 = vmatpush.bf16.xpose.msra.mxu0 0
        %1885 = vmatpush.bf16.xpose.msra.mxu0 0
        %1886 = vmatpush.bf16.xpose.msra.mxu0 0
        %1887 = vmatpush.bf16.xpose.msra.mxu0 0
        %1888 = vmatpush.bf16.xpose.msra.mxu0 0
        %1889 = vmatpush.bf16.xpose.msra.mxu0 %v1880
        %1890 = vmatmul.bf16.gmra.mxu0 %v1877
        %v1891 = vpop.f32.mrf.mxu0
        %v1892 = vadd.f32 %v896, %v1891
        %v1893 = vpop.f32.mrf.mxu0
        %1894 = vdwg.mxu0
        %v1895 = vsel %vm903, %v1892, -inf
        %1896 = vmax.xlane.f32.xlu0 %v1895
        %v1897 = vpop.xlane.xlu0 %1896
        %v1898 = vsub.f32 %v1892, %v1897
        %v1899 = vmul.f32 %v1898, 1.442695
        %v1900 = vpow.pop %v1899
        %v1901 = vsel %vm903, %v1900, 0.0
        %1902 = vadd.xlane.f32.xlu0 %v1901
        %v1903 = vpop.xlane.xlu0 %1902
        %v1904 = vpack.c.bf16 %v1900, %v1900
        %1905 = vrot.lane.b32.xlu0 %v1538, 72
        %v1906 = vpop.permute.xlu0 %1905
        %v1908 = vsel %vm903, %v1904, 0
        %v1911 = vsel %vm936, %v1906, 0
        %1913 = vmatpush.bf16.msra.mxu0 0
        %1914 = vmatpush.bf16.msra.mxu0 0
        %1915 = vmatpush.bf16.msra.mxu0 0
        %1916 = vmatpush.bf16.msra.mxu0 0
        %1917 = vmatpush.bf16.msra.mxu0 0
        %1918 = vmatpush.bf16.msra.mxu0 0
        %1919 = vmatpush.bf16.msra.mxu0 0
        %1920 = vmatpush.bf16.msra.mxu0 %v1911
        %1921 = vmatmul.bf16.gmra.mxu0 %v1908
        %v1922 = vpop.f32.mrf.mxu0
        %v1923 = vadd.f32 0.0, %v1922
        %v1924 = vpop.f32.mrf.mxu0
        %1925 = vdwg.mxu0
        %v1926 = vrcp.pop %v1903
        %v1927 = vmul.f32 %v1923, %v1926
        %1929 = vrot.lane.b32.xlu0 %v1927, 56
        %v1930 = vpop.permute.xlu0 %1929
        %1932 = vst.msk [vmem:[#allocation2] sm:$0xff] %vm1394, %v1930
        %v1933 = vld [vmem:[#allocation2] sm:$0xff]
        %v1934 = vpack.c.bf16 %v1933, %v1933
        %v1935 = vld [vmem:[#allocation15] sm:$0xf]
        %v1936 = vld [vmem:[#allocation15 + $0x4] sm:$0xf]
        %v1937 = vld [vmem:[#allocation15 + $0x8] sm:$0xf]
        %v1938 = vld [vmem:[#allocation15 + $0xc] sm:$0xf]
        %v1939 = vld [vmem:[#allocation15 + $0x10] sm:$0xf]
        %v1940 = vld [vmem:[#allocation15 + $0x14] sm:$0xf]
        %v1941 = vld [vmem:[#allocation15 + $0x18] sm:$0xf]
        %v1942 = vld [vmem:[#allocation15 + $0x1c] sm:$0xf]
        %v1943 = vld [vmem:[%s11] sm:$0x1]
        %v1945 = vperm.slane %v1943, 0
        %v1955 = vunpack.c.l.b16 %v1935
        %v1956 = vunpack.c.l.b16 %v1936
        %v1957 = vunpack.c.l.b16 %v1937
        %v1958 = vunpack.c.l.b16 %v1938
        %v1959 = vunpack.c.l.b16 %v1939
        %v1960 = vunpack.c.l.b16 %v1940
        %v1961 = vunpack.c.l.b16 %v1941
        %v1962 = vunpack.c.l.b16 %v1942
        %v1963 = vpack.c.b16 %v1956, %v1955
        %v1964 = vpack.c.b16 %v1958, %v1957
        %v1965 = vpack.c.b16 %v1960, %v1959
        %v1966 = vpack.c.b16 %v1962, %v1961
        %v1972 = vsel %vm775, %v1934, 0
        %1974 = vmatpush.bf16.msra.mxu0 0
        %1975 = vmatpush.bf16.msra.mxu0 0
        %1976 = vmatpush.bf16.msra.mxu0 0
        %1977 = vmatpush.bf16.msra.mxu0 0
        %1978 = vmatpush.bf16.msra.mxu0 %v1966
        %1979 = vmatpush.bf16.msra.mxu0 %v1965
        %1980 = vmatpush.bf16.msra.mxu0 %v1964
        %1981 = vmatpush.bf16.msra.mxu0 %v1963
        %1982 = vmatmul.bf16.gmra.mxu0 %v1972
        %v1983 = vpop.f32.mrf.mxu0
        %v1984 = vadd.f32 %v1945, %v1983
        %v1985 = vpop.f32.mrf.mxu0
        %1986 = vdwg.mxu0
        %v1987 = vpack.c.bf16 %v1447, %v1447
        %v1988 = vld [vmem:[#allocation17] sm:$0xf]
        %v1989 = vld [vmem:[#allocation17 + $0x4] sm:$0xf]
        %v1990 = vld [vmem:[#allocation17 + $0x8] sm:$0xf]
        %v1991 = vld [vmem:[#allocation17 + $0xc] sm:$0xf]
        %v1992 = vld [vmem:[#allocation17 + $0x10] sm:$0xf]
        %v1993 = vld [vmem:[#allocation17 + $0x14] sm:$0xf]
        %v1994 = vld [vmem:[#allocation17 + $0x18] sm:$0xf]
        %v1995 = vld [vmem:[#allocation17 + $0x1c] sm:$0xf]
        %v1996 = vpack.c.bf16 %v1984, %v1984
        %v1997 = vld [vmem:[#allocation18] sm:$0xf]
        %v1998 = vld [vmem:[#allocation18 + $0x4] sm:$0xf]
        %v1999 = vld [vmem:[#allocation18 + $0x8] sm:$0xf]
        %v2000 = vld [vmem:[#allocation18 + $0xc] sm:$0xf]
        %v2001 = vld [vmem:[#allocation18 + $0x10] sm:$0xf]
        %v2002 = vld [vmem:[#allocation18 + $0x14] sm:$0xf]
        %v2003 = vld [vmem:[#allocation18 + $0x18] sm:$0xf]
        %v2004 = vld [vmem:[#allocation18 + $0x1c] sm:$0xf]
        %v2013 = vunpack.c.l.b16 %v1997
        %v2014 = vunpack.c.l.b16 %v1998
        %v2015 = vunpack.c.l.b16 %v1999
        %v2016 = vunpack.c.l.b16 %v2000
        %v2017 = vunpack.c.l.b16 %v2001
        %v2018 = vunpack.c.l.b16 %v2002
        %v2019 = vunpack.c.l.b16 %v2003
        %v2020 = vunpack.c.l.b16 %v2004
        %v2021 = vpack.c.b16 %v2014, %v2013
        %v2022 = vpack.c.b16 %v2016, %v2015
        %v2023 = vpack.c.b16 %v2018, %v2017
        %v2024 = vpack.c.b16 %v2020, %v2019
        %v2030 = vsel %vm775, %v1996, 0
        %2032 = vmatpush.bf16.msra.mxu0 0
        %2033 = vmatpush.bf16.msra.mxu0 0
        %2034 = vmatpush.bf16.msra.mxu0 0
        %2035 = vmatpush.bf16.msra.mxu0 0
        %2036 = vmatpush.bf16.msra.mxu0 %v2024
        %2037 = vmatpush.bf16.msra.mxu0 %v2023
        %2038 = vmatpush.bf16.msra.mxu0 %v2022
        %2039 = vmatpush.bf16.msra.mxu0 %v2021
        %2040 = vmatmul.bf16.gmra.mxu0 %v2030
        %v2041 = vpop.f32.mrf.mxu0
        %v2042 = vadd.f32 0.0, %v2041
        %v2043 = vpop.f32.mrf.mxu0
        %2044 = vdwg.mxu0
        %v2053 = vunpack.c.l.b16 %v1988
        %v2054 = vunpack.c.l.b16 %v1989
        %v2055 = vunpack.c.l.b16 %v1990
        %v2056 = vunpack.c.l.b16 %v1991
        %v2057 = vunpack.c.l.b16 %v1992
        %v2058 = vunpack.c.l.b16 %v1993
        %v2059 = vunpack.c.l.b16 %v1994
        %v2060 = vunpack.c.l.b16 %v1995
        %v2061 = vpack.c.b16 %v2054, %v2053
        %v2062 = vpack.c.b16 %v2056, %v2055
        %v2063 = vpack.c.b16 %v2058, %v2057
        %v2064 = vpack.c.b16 %v2060, %v2059
        %v2070 = vsel %vm775, %v1987, 0
        %2072 = vmatpush.bf16.msra.mxu0 0
        %2073 = vmatpush.bf16.msra.mxu0 0
        %2074 = vmatpush.bf16.msra.mxu0 0
        %2075 = vmatpush.bf16.msra.mxu0 0
        %2076 = vmatpush.bf16.msra.mxu0 %v2064
        %2077 = vmatpush.bf16.msra.mxu0 %v2063
        %2078 = vmatpush.bf16.msra.mxu0 %v2062
        %2079 = vmatpush.bf16.msra.mxu0 %v2061
        %2080 = vmatmul.bf16.gmra.mxu0 %v2070
        %v2081 = vpop.f32.mrf.mxu0
        %v2082 = vadd.f32 %v2042, %v2081
        %v2083 = vpop.f32.mrf.mxu0
        %2084 = vdwg.mxu0
        %v2085 = vld [vmem:[%s14] sm:$0x1]
        %v2087 = vperm.slane %v2085, 0
        %v2089 = vadd.f32 %v2082, %v2087
        %2090 = vst [vmem:[%s676] sm:$0xff] %v2089
        %s2091 = sand.u32 %s372, 1
        %s2092 = scalar_lea.sflag [#allocation5], %s2091
        %s2093 = sand.u32 %s372, 1
        %s2094 = smul.addr %s2093, 8
        %s2095 = scalar_lea.vmem [#allocation20], %s2094
        // Predicated region
        $region121: #{tpu_custom_call.1} parent=79 // pred_check
          %p2096 = pneg %p382
        $region122: #{tpu_custom_call.1} parent=79 // pred_check_branch
          %2098 = sbr.rel (%p2096) target = $region124
        $region123: #{tpu_custom_call.1} parent=79 // pred_region
          %2100 = vsyncadd %s2092, 0
          %s2101 = smul.addr %s39, 8
          %s2102 = scalar_lea.hbm %s15, %s2101
          %s2104 = sshll.u32 %s2095, 4
          %s2105 = int_to_ptr.vmem [resolvable:$true] %s2104
          %s2106 = sshll.u32 %s2102, 4
          %s2107 = int_to_ptr.hbm [resolvable:$true] %s2106
          %2109 = dma.vmem_to_hbm [thread:$0]  %s2105, 128, %s2107, %s2092
        $region124: #{tpu_custom_call.1} parent=79 // pred_fallthru
          _
      $region80: #{tpu_custom_call.1} parent=5 // pred_fallthru
        _
      %p2110 = scmp.le.s32.totalorder 2, %s34
      // Predicated region
      $region125: #{tpu_custom_call.1} parent=5 // pred_check
        %p2111 = pneg %p2110
      $region126: #{tpu_custom_call.1} parent=5 // pred_check_branch
        %2113 = sbr.rel (%p2111) target = $region128
      $region127: #{tpu_custom_call.1} parent=5 // pred_region
        %s2114 = ssub.s32 %s34, 2
        // Predicated region
        $region129: #{tpu_custom_call.1} parent=127 // pred_check
          %p2115 = pneg %p388
        $region130: #{tpu_custom_call.1} parent=127 // pred_check_branch
          %2117 = sbr.rel (%p2115) target = $region132
        $region131: #{tpu_custom_call.1} parent=127 // pred_region
          %s2118 = sand.u32 %s373, 1
          %s2119 = scalar_lea.sflag [#allocation5], %s2118
          %s2120 = sand.u32 %s373, 1
          %s2121 = smul.addr %s2120, 8
          %s2122 = scalar_lea.vmem [#allocation20], %s2121
          %2124 = dma.done %s2119, 128
        $region132: #{tpu_custom_call.1} parent=127 // pred_fallthru
          _
      $region128: #{tpu_custom_call.1} parent=5 // pred_fallthru
        _
    $region6: #{tpu_custom_call.1} parent=1 // loop_footer
      %s38 = sadd.s32 1, %s34
    $region7: #{tpu_custom_call.1} parent=1 // loop_footer_branch
      %33 = sbr.rel target = $region3
    $region8: #{tpu_custom_call.1} parent=1 // loop_exit
      _
    %2125 = vsyncpa [#allocation4], 1
    %s2126 = scalar_lea.sflag [#allocation4], 1
    %2127 = vsyncpa %s2126, 1
    %2128 = vsyncpa [#allocation7], 1
    %s2129 = scalar_lea.sflag [#allocation7], 1
    %2130 = vsyncpa %s2129, 1
    %2131 = vsyncpa [#allocation10], 1
    %2132 = vsyncpa [#allocation13], 1
    %2133 = vsyncpa [#allocation16], 1
    %2134 = vsyncpa [#allocation19], 1
    %2135 = vsyncpa [#allocation5], 1
    %s2136 = scalar_lea.sflag [#allocation5], 1
    %2137 = vsyncpa %s2136, 1

</llo_original>
